<compile_context>
chip_gen: v7x
topology: tpu7x:2x2x1
jax: 0.10.0
libtpu: 0.0.40
codegen_flags: <defaults>
</compile_context>

<pallas_src>
import jax
import jax.numpy as jnp
import numpy as np
from jax import lax
from jax.experimental import pallas as pl
from jax.experimental.pallas import tpu as pltpu

# ---- small shapes consistent with the module's forward ----
B = 2          # batch
T = 8          # sequence length
VOCAB = 64     # w2v vocabulary size
E = 32         # embd_dim
H = 32         # lstm_hidden
D = 32         # dense_hidden
C = 8          # n_classes


# ---------------- single fused Pallas kernel ----------------
def att_lstm_kernel(tok_ref, emb_ref, wf_ref, bf_ref, wb_ref, bb_ref,
                    wd_ref, bd_ref, wo_ref, bo_ref, out_ref):
    T_, B_ = tok_ref.shape
    H4 = wf_ref.shape[1]
    H_ = H4 // 4

    # Hoisted full-width bias broadcasts: one broadcast each, reused by every
    # unrolled timestep (JAX does not CSE broadcast_in_dim emitted in a loop).
    bf = jnp.broadcast_to(bf_ref[...], (B_, H4))
    bb = jnp.broadcast_to(bb_ref[...], (B_, H4))

    # ---- in-kernel embedding gather (tokens in SMEM, table in VMEM) ----
    # emb_ref is (VOCAB, 1, E): dynamic scalar index on the untiled leading
    # axis -> clean (1, E) tile load per token.
    xs = []
    for t in range(T_):
        rows = [emb_ref[tok_ref[t, b]] for b in range(B_)]   # each (1, E)
        xs.append(jnp.concatenate(rows, axis=0))             # (B, E)

    def cell(x_t, h, c, w_ref, b_full):
        # one fused gate matmul: [x_t, h] @ [W_ih^T ; W_hh^T]  -> (B, 4H)
        xh = jnp.concatenate([x_t, h], axis=-1)              # (B, E+H)
        g = jnp.dot(xh, w_ref[...],
                    preferred_element_type=jnp.float32) + b_full
        # full-tile transcendentals (2 EUP issues instead of 4 sliced ones)
        s = jax.nn.sigmoid(g)
        th = jnp.tanh(g)
        i_g = s[:, 0:H_]
        f_g = s[:, H_:2 * H_]
        g_g = th[:, 2 * H_:3 * H_]
        o_g = s[:, 3 * H_:4 * H_]
        c_new = f_g * c + i_g * g_g
        h_new = o_g * jnp.tanh(c_new)
        return h_new, c_new

    zeros = jnp.zeros((B_, H_), jnp.float32)
    h_f, c_f, h_b, c_b = zeros, zeros, zeros, zeros
    hs_f = [None] * T_
    hs_b = [None] * T_
    # Fully unrolled recurrence; the two independent direction chains are
    # interleaved in one loop body so the scheduler can overlap them.
    for t in range(T_):
        h_f, c_f = cell(xs[t], h_f, c_f, wf_ref, bf)
        h_b, c_b = cell(xs[T_ - 1 - t], h_b, c_b, wb_ref, bb)
        hs_f[t] = h_f
        hs_b[T_ - 1 - t] = h_b

    # ---- query: exact semantics of torch's final_hidden_state.view(-1, 2H, 1)
    # on the contiguous (2, B, H) h_n tensor (mixes direction/batch when B>1).
    hN = (h_f, h_b)
    qf = jnp.concatenate(
        [hN[(2 * r) // B_][(2 * r) % B_:(2 * r) % B_ + 1, :]
         for r in range(B_)], axis=0)                         # (B, H)
    qb = jnp.concatenate(
        [hN[(2 * r + 1) // B_][(2 * r + 1) % B_:(2 * r + 1) % B_ + 1, :]
         for r in range(B_)], axis=0)                         # (B, H)

    # attention scores over time; softmax along the lane axis
    cols = [jnp.sum(hs_f[t] * qf, axis=-1, keepdims=True)
            + jnp.sum(hs_b[t] * qb, axis=-1, keepdims=True)
            for t in range(T_)]
    scores = jnp.concatenate(cols, axis=1)                    # (B, T)
    m = jnp.max(scores, axis=1, keepdims=True)
    p = jnp.exp(scores - m)
    w_att = p / jnp.sum(p, axis=1, keepdims=True)             # (B, T)

    attn_f = zeros
    attn_b = zeros
    for t in range(T_):
        attn_f = attn_f + w_att[:, t:t + 1] * hs_f[t]
        attn_b = attn_b + w_att[:, t:t + 1] * hs_b[t]
    attn = jnp.concatenate([attn_f, attn_b], axis=1)          # (B, 2H)

    d = (jnp.dot(attn, wd_ref[...], preferred_element_type=jnp.float32)
         + bd_ref[...])                                       # (B, D)
    out_ref[...] = (jnp.dot(d, wo_ref[...], preferred_element_type=jnp.float32)
                    + bo_ref[...])                            # (B, C)


# ---------------- wrapper ----------------
def att_lstm_forward(tokens, params):
    tok_tb = tokens.T.astype(jnp.int32)                       # (T, B) time-major
    emb_3d = params["embed"][:, None, :]                      # (VOCAB, 1, E)

    # fused per-direction gate weights: (E+H, 4H), PyTorch gate order i,f,g,o
    w_f = jnp.concatenate([params["w_ih_f"].T, params["w_hh_f"].T], axis=0)
    w_b = jnp.concatenate([params["w_ih_b"].T, params["w_hh_b"].T], axis=0)
    b_f = (params["b_ih_f"] + params["b_hh_f"])[None, :]
    b_b = (params["b_ih_b"] + params["b_hh_b"])[None, :]

    vmem = pl.BlockSpec(memory_space=pltpu.MemorySpace.VMEM)
    smem = pl.BlockSpec(memory_space=pltpu.MemorySpace.SMEM)

    # Whole arrays in VMEM, no grid: the entire working set is tens of KB, and
    # a grid would only add per-step overhead at these shapes.
    logits = pl.pallas_call(
        att_lstm_kernel,
        out_shape=jax.ShapeDtypeStruct((B, C), jnp.float32),
        in_specs=[smem] + [vmem] * 9,
        out_specs=vmem,
    )(tok_tb, emb_3d,
      w_f, b_f, w_b, b_b,
      params["dense_w"].T, params["dense_b"][None, :],
      params["out_w"].T, params["out_b"][None, :])
    return logits


# ---------------- pure-JAX reference (for correctness check) ----------------
def reference_forward(tokens, params):
    emb = params["embed"][tokens]                 # (B, T, E)
    xs = jnp.swapaxes(emb, 0, 1)                  # (T, B, E)

    def run_dir(xs, w_ih, w_hh, b, reverse):
        h0 = jnp.zeros((B, H), jnp.float32)
        c0 = jnp.zeros((B, H), jnp.float32)
        seq = xs[::-1] if reverse else xs

        def step(carry, x_t):
            h, c = carry
            g = x_t @ w_ih.T + h @ w_hh.T + b
            i = jax.nn.sigmoid(g[:, :H])
            f = jax.nn.sigmoid(g[:, H:2 * H])
            gg = jnp.tanh(g[:, 2 * H:3 * H])
            o = jax.nn.sigmoid(g[:, 3 * H:])
            c = f * c + i * gg
            h = o * jnp.tanh(c)
            return (h, c), h

        (hN, _), hs = lax.scan(step, (h0, c0), seq)
        if reverse:
            hs = hs[::-1]
        return hs, hN

    hs_f, hN_f = run_dir(xs, params["w_ih_f"], params["w_hh_f"],
                         params["b_ih_f"] + params["b_hh_f"], False)
    hs_b, hN_b = run_dir(xs, params["w_ih_b"], params["w_hh_b"],
                         params["b_ih_b"] + params["b_hh_b"], True)
    lstm_out = jnp.swapaxes(jnp.concatenate([hs_f, hs_b], axis=-1), 0, 1)   # (B,T,2H)
    fh = jnp.stack([hN_f, hN_b], axis=0)                                     # (2,B,H)
    query = fh.reshape(-1, 2 * H, 1)                                         # (B,2H,1)
    attn_w = jnp.einsum("btk,bko->bt", lstm_out, query)
    soft = jax.nn.softmax(attn_w, axis=1)
    attn_out = jnp.einsum("btk,bt->bk", lstm_out, soft)
    d = attn_out @ params["dense_w"].T + params["dense_b"]
    return d @ params["out_w"].T + params["out_b"]


if __name__ == "__main__":
    key = jax.random.PRNGKey(0)
    ks = jax.random.split(key, 16)
    scale = 0.1
    params = {
        # "pretrained" w2v embedding table (synthetic, deterministic)
        "embed":   jax.random.normal(ks[0], (VOCAB, E), jnp.float32),
        # LSTM (PyTorch parameter shapes)
        "w_ih_f":  jax.random.normal(ks[1], (4 * H, E), jnp.float32) * scale,
        "w_hh_f":  jax.random.normal(ks[2], (4 * H, H), jnp.float32) * scale,
        "b_ih_f":  jax.random.normal(ks[3], (4 * H,), jnp.float32) * scale,
        "b_hh_f":  jax.random.normal(ks[4], (4 * H,), jnp.float32) * scale,
        "w_ih_b":  jax.random.normal(ks[5], (4 * H, E), jnp.float32) * scale,
        "w_hh_b":  jax.random.normal(ks[6], (4 * H, H), jnp.float32) * scale,
        "b_ih_b":  jax.random.normal(ks[7], (4 * H,), jnp.float32) * scale,
        "b_hh_b":  jax.random.normal(ks[8], (4 * H,), jnp.float32) * scale,
        # dense / out Linear layers
        "dense_w": jax.random.normal(ks[9], (D, 2 * H), jnp.float32) * scale,
        "dense_b": jax.random.normal(ks[10], (D,), jnp.float32) * scale,
        "out_w":   jax.random.normal(ks[11], (C, D), jnp.float32) * scale,
        "out_b":   jax.random.normal(ks[12], (C,), jnp.float32) * scale,
    }
    tokens = jax.random.randint(ks[13], (B, T), 0, VOCAB, dtype=jnp.int32)

    logits = jax.jit(att_lstm_forward)(tokens, params)
    logits = jax.block_until_ready(logits)

    ref = reference_forward(tokens, params)
    assert logits.shape == (B, C)
    np.testing.assert_allclose(np.asarray(logits), np.asarray(ref),
                               rtol=2e-3, atol=2e-3)
    print("KERNEL_OK")
</pallas_src>

<mosaic_0001>
module attributes {stable_mosaic.version = 11 : i64} {
  func.func @att_lstm_kernel(%arg0: memref<8x2xi32, #tpu.memory_space<smem>>, %arg1: memref<64x1x32xf32, #tpu.memory_space<vmem>>, %arg2: memref<64x128xf32, #tpu.memory_space<vmem>>, %arg3: memref<1x128xf32, #tpu.memory_space<vmem>>, %arg4: memref<64x128xf32, #tpu.memory_space<vmem>>, %arg5: memref<1x128xf32, #tpu.memory_space<vmem>>, %arg6: memref<64x32xf32, #tpu.memory_space<vmem>>, %arg7: memref<1x32xf32, #tpu.memory_space<vmem>>, %arg8: memref<32x8xf32, #tpu.memory_space<vmem>>, %arg9: memref<1x8xf32, #tpu.memory_space<vmem>>, %arg10: memref<2x8xf32, #tpu.memory_space<vmem>>) attributes {dimension_semantics = [], scalar_prefetch = 0 : i64, scratch_operands = 0 : i64, tpu.core_type = #tpu.core_type<tc>} {
    %c0 = arith.constant 0 : index
    %c0_0 = arith.constant 0 : index
    %0 = vector.load %arg3[%c0, %c0_0] : memref<1x128xf32, #tpu.memory_space<vmem>>, vector<1x128xf32>
    %1 = vector.shape_cast %0 : vector<1x128xf32> to vector<1x128xf32>
    %2 = vector.broadcast %1 : vector<1x128xf32> to vector<2x128xf32>
    %c0_1 = arith.constant 0 : index
    %c0_2 = arith.constant 0 : index
    %3 = vector.load %arg5[%c0_1, %c0_2] : memref<1x128xf32, #tpu.memory_space<vmem>>, vector<1x128xf32>
    %4 = vector.shape_cast %3 : vector<1x128xf32> to vector<1x128xf32>
    %5 = vector.broadcast %4 : vector<1x128xf32> to vector<2x128xf32>
    %c0_3 = arith.constant 0 : index
    %c0_4 = arith.constant 0 : index
    %6 = memref.load %arg0[%c0_3, %c0_4] : memref<8x2xi32, #tpu.memory_space<smem>>
    %7 = arith.index_cast %6 : i32 to index
    %c0_5 = arith.constant 0 : index
    %c0_6 = arith.constant 0 : index
    %8 = vector.load %arg1[%7, %c0_5, %c0_6] : memref<64x1x32xf32, #tpu.memory_space<vmem>>, vector<1x1x32xf32>
    %9 = vector.shape_cast %8 : vector<1x1x32xf32> to vector<1x32xf32>
    %c0_7 = arith.constant 0 : index
    %c1 = arith.constant 1 : index
    %10 = memref.load %arg0[%c0_7, %c1] : memref<8x2xi32, #tpu.memory_space<smem>>
    %11 = arith.index_cast %10 : i32 to index
    %c0_8 = arith.constant 0 : index
    %c0_9 = arith.constant 0 : index
    %12 = vector.load %arg1[%11, %c0_8, %c0_9] : memref<64x1x32xf32, #tpu.memory_space<vmem>>, vector<1x1x32xf32>
    %13 = vector.shape_cast %12 : vector<1x1x32xf32> to vector<1x32xf32>
    %14 = tpu.concatenate %9, %13 in 0 : vector<1x32xf32>, vector<1x32xf32> -> vector<2x32xf32>
    %c1_10 = arith.constant 1 : index
    %c0_11 = arith.constant 0 : index
    %15 = memref.load %arg0[%c1_10, %c0_11] : memref<8x2xi32, #tpu.memory_space<smem>>
    %16 = arith.index_cast %15 : i32 to index
    %c0_12 = arith.constant 0 : index
    %c0_13 = arith.constant 0 : index
    %17 = vector.load %arg1[%16, %c0_12, %c0_13] : memref<64x1x32xf32, #tpu.memory_space<vmem>>, vector<1x1x32xf32>
    %18 = vector.shape_cast %17 : vector<1x1x32xf32> to vector<1x32xf32>
    %c1_14 = arith.constant 1 : index
    %c1_15 = arith.constant 1 : index
    %19 = memref.load %arg0[%c1_14, %c1_15] : memref<8x2xi32, #tpu.memory_space<smem>>
    %20 = arith.index_cast %19 : i32 to index
    %c0_16 = arith.constant 0 : index
    %c0_17 = arith.constant 0 : index
    %21 = vector.load %arg1[%20, %c0_16, %c0_17] : memref<64x1x32xf32, #tpu.memory_space<vmem>>, vector<1x1x32xf32>
    %22 = vector.shape_cast %21 : vector<1x1x32xf32> to vector<1x32xf32>
    %23 = tpu.concatenate %18, %22 in 0 : vector<1x32xf32>, vector<1x32xf32> -> vector<2x32xf32>
    %c2 = arith.constant 2 : index
    %c0_18 = arith.constant 0 : index
    %24 = memref.load %arg0[%c2, %c0_18] : memref<8x2xi32, #tpu.memory_space<smem>>
    %25 = arith.index_cast %24 : i32 to index
    %c0_19 = arith.constant 0 : index
    %c0_20 = arith.constant 0 : index
    %26 = vector.load %arg1[%25, %c0_19, %c0_20] : memref<64x1x32xf32, #tpu.memory_space<vmem>>, vector<1x1x32xf32>
    %27 = vector.shape_cast %26 : vector<1x1x32xf32> to vector<1x32xf32>
    %c2_21 = arith.constant 2 : index
    %c1_22 = arith.constant 1 : index
    %28 = memref.load %arg0[%c2_21, %c1_22] : memref<8x2xi32, #tpu.memory_space<smem>>
    %29 = arith.index_cast %28 : i32 to index
    %c0_23 = arith.constant 0 : index
    %c0_24 = arith.constant 0 : index
    %30 = vector.load %arg1[%29, %c0_23, %c0_24] : memref<64x1x32xf32, #tpu.memory_space<vmem>>, vector<1x1x32xf32>
    %31 = vector.shape_cast %30 : vector<1x1x32xf32> to vector<1x32xf32>
    %32 = tpu.concatenate %27, %31 in 0 : vector<1x32xf32>, vector<1x32xf32> -> vector<2x32xf32>
    %c3 = arith.constant 3 : index
    %c0_25 = arith.constant 0 : index
    %33 = memref.load %arg0[%c3, %c0_25] : memref<8x2xi32, #tpu.memory_space<smem>>
    %34 = arith.index_cast %33 : i32 to index
    %c0_26 = arith.constant 0 : index
    %c0_27 = arith.constant 0 : index
    %35 = vector.load %arg1[%34, %c0_26, %c0_27] : memref<64x1x32xf32, #tpu.memory_space<vmem>>, vector<1x1x32xf32>
    %36 = vector.shape_cast %35 : vector<1x1x32xf32> to vector<1x32xf32>
    %c3_28 = arith.constant 3 : index
    %c1_29 = arith.constant 1 : index
    %37 = memref.load %arg0[%c3_28, %c1_29] : memref<8x2xi32, #tpu.memory_space<smem>>
    %38 = arith.index_cast %37 : i32 to index
    %c0_30 = arith.constant 0 : index
    %c0_31 = arith.constant 0 : index
    %39 = vector.load %arg1[%38, %c0_30, %c0_31] : memref<64x1x32xf32, #tpu.memory_space<vmem>>, vector<1x1x32xf32>
    %40 = vector.shape_cast %39 : vector<1x1x32xf32> to vector<1x32xf32>
    %41 = tpu.concatenate %36, %40 in 0 : vector<1x32xf32>, vector<1x32xf32> -> vector<2x32xf32>
    %c4 = arith.constant 4 : index
    %c0_32 = arith.constant 0 : index
    %42 = memref.load %arg0[%c4, %c0_32] : memref<8x2xi32, #tpu.memory_space<smem>>
    %43 = arith.index_cast %42 : i32 to index
    %c0_33 = arith.constant 0 : index
    %c0_34 = arith.constant 0 : index
    %44 = vector.load %arg1[%43, %c0_33, %c0_34] : memref<64x1x32xf32, #tpu.memory_space<vmem>>, vector<1x1x32xf32>
    %45 = vector.shape_cast %44 : vector<1x1x32xf32> to vector<1x32xf32>
    %c4_35 = arith.constant 4 : index
    %c1_36 = arith.constant 1 : index
    %46 = memref.load %arg0[%c4_35, %c1_36] : memref<8x2xi32, #tpu.memory_space<smem>>
    %47 = arith.index_cast %46 : i32 to index
    %c0_37 = arith.constant 0 : index
    %c0_38 = arith.constant 0 : index
    %48 = vector.load %arg1[%47, %c0_37, %c0_38] : memref<64x1x32xf32, #tpu.memory_space<vmem>>, vector<1x1x32xf32>
    %49 = vector.shape_cast %48 : vector<1x1x32xf32> to vector<1x32xf32>
    %50 = tpu.concatenate %45, %49 in 0 : vector<1x32xf32>, vector<1x32xf32> -> vector<2x32xf32>
    %c5 = arith.constant 5 : index
    %c0_39 = arith.constant 0 : index
    %51 = memref.load %arg0[%c5, %c0_39] : memref<8x2xi32, #tpu.memory_space<smem>>
    %52 = arith.index_cast %51 : i32 to index
    %c0_40 = arith.constant 0 : index
    %c0_41 = arith.constant 0 : index
    %53 = vector.load %arg1[%52, %c0_40, %c0_41] : memref<64x1x32xf32, #tpu.memory_space<vmem>>, vector<1x1x32xf32>
    %54 = vector.shape_cast %53 : vector<1x1x32xf32> to vector<1x32xf32>
    %c5_42 = arith.constant 5 : index
    %c1_43 = arith.constant 1 : index
    %55 = memref.load %arg0[%c5_42, %c1_43] : memref<8x2xi32, #tpu.memory_space<smem>>
    %56 = arith.index_cast %55 : i32 to index
    %c0_44 = arith.constant 0 : index
    %c0_45 = arith.constant 0 : index
    %57 = vector.load %arg1[%56, %c0_44, %c0_45] : memref<64x1x32xf32, #tpu.memory_space<vmem>>, vector<1x1x32xf32>
    %58 = vector.shape_cast %57 : vector<1x1x32xf32> to vector<1x32xf32>
    %59 = tpu.concatenate %54, %58 in 0 : vector<1x32xf32>, vector<1x32xf32> -> vector<2x32xf32>
    %c6 = arith.constant 6 : index
    %c0_46 = arith.constant 0 : index
    %60 = memref.load %arg0[%c6, %c0_46] : memref<8x2xi32, #tpu.memory_space<smem>>
    %61 = arith.index_cast %60 : i32 to index
    %c0_47 = arith.constant 0 : index
    %c0_48 = arith.constant 0 : index
    %62 = vector.load %arg1[%61, %c0_47, %c0_48] : memref<64x1x32xf32, #tpu.memory_space<vmem>>, vector<1x1x32xf32>
    %63 = vector.shape_cast %62 : vector<1x1x32xf32> to vector<1x32xf32>
    %c6_49 = arith.constant 6 : index
    %c1_50 = arith.constant 1 : index
    %64 = memref.load %arg0[%c6_49, %c1_50] : memref<8x2xi32, #tpu.memory_space<smem>>
    %65 = arith.index_cast %64 : i32 to index
    %c0_51 = arith.constant 0 : index
    %c0_52 = arith.constant 0 : index
    %66 = vector.load %arg1[%65, %c0_51, %c0_52] : memref<64x1x32xf32, #tpu.memory_space<vmem>>, vector<1x1x32xf32>
    %67 = vector.shape_cast %66 : vector<1x1x32xf32> to vector<1x32xf32>
    %68 = tpu.concatenate %63, %67 in 0 : vector<1x32xf32>, vector<1x32xf32> -> vector<2x32xf32>
    %c7 = arith.constant 7 : index
    %c0_53 = arith.constant 0 : index
    %69 = memref.load %arg0[%c7, %c0_53] : memref<8x2xi32, #tpu.memory_space<smem>>
    %70 = arith.index_cast %69 : i32 to index
    %c0_54 = arith.constant 0 : index
    %c0_55 = arith.constant 0 : index
    %71 = vector.load %arg1[%70, %c0_54, %c0_55] : memref<64x1x32xf32, #tpu.memory_space<vmem>>, vector<1x1x32xf32>
    %72 = vector.shape_cast %71 : vector<1x1x32xf32> to vector<1x32xf32>
    %c7_56 = arith.constant 7 : index
    %c1_57 = arith.constant 1 : index
    %73 = memref.load %arg0[%c7_56, %c1_57] : memref<8x2xi32, #tpu.memory_space<smem>>
    %74 = arith.index_cast %73 : i32 to index
    %c0_58 = arith.constant 0 : index
    %c0_59 = arith.constant 0 : index
    %75 = vector.load %arg1[%74, %c0_58, %c0_59] : memref<64x1x32xf32, #tpu.memory_space<vmem>>, vector<1x1x32xf32>
    %76 = vector.shape_cast %75 : vector<1x1x32xf32> to vector<1x32xf32>
    %77 = tpu.concatenate %72, %76 in 0 : vector<1x32xf32>, vector<1x32xf32> -> vector<2x32xf32>
    %cst = arith.constant 0.000000e+00 : f32
    %78 = vector.broadcast %cst : f32 to vector<2x32xf32>
    %79 = tpu.concatenate %14, %78 in 1 : vector<2x32xf32>, vector<2x32xf32> -> vector<2x64xf32>
    %c0_60 = arith.constant 0 : index
    %c0_61 = arith.constant 0 : index
    %80 = vector.load %arg2[%c0_60, %c0_61] : memref<64x128xf32, #tpu.memory_space<vmem>>, vector<64x128xf32>
    %cst_62 = arith.constant dense<0.000000e+00> : vector<2x128xf32>
    %81 = tpu.matmul %79, %80, %cst_62 {dimension_numbers = #tpu.dot_dimension_numbers<[1], [0], [0], [1], [0, 0, 1, 1], [], []>} : vector<2x64xf32>, vector<64x128xf32>, vector<2x128xf32> -> vector<2x128xf32>
    %82 = arith.addf %81, %2 : vector<2x128xf32>
    %83 = arith.negf %82 : vector<2x128xf32>
    %84 = math.exp %83 : vector<2x128xf32>
    %cst_63 = arith.constant 1.000000e+00 : f32
    %85 = vector.broadcast %cst_63 : f32 to vector<2x128xf32>
    %86 = arith.addf %85, %84 : vector<2x128xf32>
    %87 = arith.divf %85, %86 : vector<2x128xf32>
    %88 = math.tanh %82 : vector<2x128xf32>
    %89 = vector.extract_strided_slice %87 {offsets = [0, 0], sizes = [2, 32], strides = [1, 1]} : vector<2x128xf32> to vector<2x32xf32>
    %90 = vector.extract_strided_slice %87 {offsets = [0, 32], sizes = [2, 32], strides = [1, 1]} : vector<2x128xf32> to vector<2x32xf32>
    %91 = vector.extract_strided_slice %88 {offsets = [0, 64], sizes = [2, 32], strides = [1, 1]} : vector<2x128xf32> to vector<2x32xf32>
    %92 = vector.extract_strided_slice %87 {offsets = [0, 96], sizes = [2, 32], strides = [1, 1]} : vector<2x128xf32> to vector<2x32xf32>
    %93 = arith.mulf %90, %78 : vector<2x32xf32>
    %94 = arith.mulf %89, %91 : vector<2x32xf32>
    %95 = arith.addf %93, %94 : vector<2x32xf32>
    %96 = math.tanh %95 : vector<2x32xf32>
    %97 = arith.mulf %92, %96 : vector<2x32xf32>
    %98 = tpu.concatenate %77, %78 in 1 : vector<2x32xf32>, vector<2x32xf32> -> vector<2x64xf32>
    %c0_64 = arith.constant 0 : index
    %c0_65 = arith.constant 0 : index
    %99 = vector.load %arg4[%c0_64, %c0_65] : memref<64x128xf32, #tpu.memory_space<vmem>>, vector<64x128xf32>
    %cst_66 = arith.constant dense<0.000000e+00> : vector<2x128xf32>
    %100 = tpu.matmul %98, %99, %cst_66 {dimension_numbers = #tpu.dot_dimension_numbers<[1], [0], [0], [1], [0, 0, 1, 1], [], []>} : vector<2x64xf32>, vector<64x128xf32>, vector<2x128xf32> -> vector<2x128xf32>
    %101 = arith.addf %100, %5 : vector<2x128xf32>
    %102 = arith.negf %101 : vector<2x128xf32>
    %103 = math.exp %102 : vector<2x128xf32>
    %cst_67 = arith.constant 1.000000e+00 : f32
    %104 = vector.broadcast %cst_67 : f32 to vector<2x128xf32>
    %105 = arith.addf %104, %103 : vector<2x128xf32>
    %106 = arith.divf %104, %105 : vector<2x128xf32>
    %107 = math.tanh %101 : vector<2x128xf32>
    %108 = vector.extract_strided_slice %106 {offsets = [0, 0], sizes = [2, 32], strides = [1, 1]} : vector<2x128xf32> to vector<2x32xf32>
    %109 = vector.extract_strided_slice %106 {offsets = [0, 32], sizes = [2, 32], strides = [1, 1]} : vector<2x128xf32> to vector<2x32xf32>
    %110 = vector.extract_strided_slice %107 {offsets = [0, 64], sizes = [2, 32], strides = [1, 1]} : vector<2x128xf32> to vector<2x32xf32>
    %111 = vector.extract_strided_slice %106 {offsets = [0, 96], sizes = [2, 32], strides = [1, 1]} : vector<2x128xf32> to vector<2x32xf32>
    %112 = arith.mulf %109, %78 : vector<2x32xf32>
    %113 = arith.mulf %108, %110 : vector<2x32xf32>
    %114 = arith.addf %112, %113 : vector<2x32xf32>
    %115 = math.tanh %114 : vector<2x32xf32>
    %116 = arith.mulf %111, %115 : vector<2x32xf32>
    %117 = tpu.concatenate %23, %97 in 1 : vector<2x32xf32>, vector<2x32xf32> -> vector<2x64xf32>
    %c0_68 = arith.constant 0 : index
    %c0_69 = arith.constant 0 : index
    %118 = vector.load %arg2[%c0_68, %c0_69] : memref<64x128xf32, #tpu.memory_space<vmem>>, vector<64x128xf32>
    %cst_70 = arith.constant dense<0.000000e+00> : vector<2x128xf32>
    %119 = tpu.matmul %117, %118, %cst_70 {dimension_numbers = #tpu.dot_dimension_numbers<[1], [0], [0], [1], [0, 0, 1, 1], [], []>} : vector<2x64xf32>, vector<64x128xf32>, vector<2x128xf32> -> vector<2x128xf32>
    %120 = arith.addf %119, %2 : vector<2x128xf32>
    %121 = arith.negf %120 : vector<2x128xf32>
    %122 = math.exp %121 : vector<2x128xf32>
    %cst_71 = arith.constant 1.000000e+00 : f32
    %123 = vector.broadcast %cst_71 : f32 to vector<2x128xf32>
    %124 = arith.addf %123, %122 : vector<2x128xf32>
    %125 = arith.divf %123, %124 : vector<2x128xf32>
    %126 = math.tanh %120 : vector<2x128xf32>
    %127 = vector.extract_strided_slice %125 {offsets = [0, 0], sizes = [2, 32], strides = [1, 1]} : vector<2x128xf32> to vector<2x32xf32>
    %128 = vector.extract_strided_slice %125 {offsets = [0, 32], sizes = [2, 32], strides = [1, 1]} : vector<2x128xf32> to vector<2x32xf32>
    %129 = vector.extract_strided_slice %126 {offsets = [0, 64], sizes = [2, 32], strides = [1, 1]} : vector<2x128xf32> to vector<2x32xf32>
    %130 = vector.extract_strided_slice %125 {offsets = [0, 96], sizes = [2, 32], strides = [1, 1]} : vector<2x128xf32> to vector<2x32xf32>
    %131 = arith.mulf %128, %95 : vector<2x32xf32>
    %132 = arith.mulf %127, %129 : vector<2x32xf32>
    %133 = arith.addf %131, %132 : vector<2x32xf32>
    %134 = math.tanh %133 : vector<2x32xf32>
    %135 = arith.mulf %130, %134 : vector<2x32xf32>
    %136 = tpu.concatenate %68, %116 in 1 : vector<2x32xf32>, vector<2x32xf32> -> vector<2x64xf32>
    %c0_72 = arith.constant 0 : index
    %c0_73 = arith.constant 0 : index
    %137 = vector.load %arg4[%c0_72, %c0_73] : memref<64x128xf32, #tpu.memory_space<vmem>>, vector<64x128xf32>
    %cst_74 = arith.constant dense<0.000000e+00> : vector<2x128xf32>
    %138 = tpu.matmul %136, %137, %cst_74 {dimension_numbers = #tpu.dot_dimension_numbers<[1], [0], [0], [1], [0, 0, 1, 1], [], []>} : vector<2x64xf32>, vector<64x128xf32>, vector<2x128xf32> -> vector<2x128xf32>
    %139 = arith.addf %138, %5 : vector<2x128xf32>
    %140 = arith.negf %139 : vector<2x128xf32>
    %141 = math.exp %140 : vector<2x128xf32>
    %cst_75 = arith.constant 1.000000e+00 : f32
    %142 = vector.broadcast %cst_75 : f32 to vector<2x128xf32>
    %143 = arith.addf %142, %141 : vector<2x128xf32>
    %144 = arith.divf %142, %143 : vector<2x128xf32>
    %145 = math.tanh %139 : vector<2x128xf32>
    %146 = vector.extract_strided_slice %144 {offsets = [0, 0], sizes = [2, 32], strides = [1, 1]} : vector<2x128xf32> to vector<2x32xf32>
    %147 = vector.extract_strided_slice %144 {offsets = [0, 32], sizes = [2, 32], strides = [1, 1]} : vector<2x128xf32> to vector<2x32xf32>
    %148 = vector.extract_strided_slice %145 {offsets = [0, 64], sizes = [2, 32], strides = [1, 1]} : vector<2x128xf32> to vector<2x32xf32>
    %149 = vector.extract_strided_slice %144 {offsets = [0, 96], sizes = [2, 32], strides = [1, 1]} : vector<2x128xf32> to vector<2x32xf32>
    %150 = arith.mulf %147, %114 : vector<2x32xf32>
    %151 = arith.mulf %146, %148 : vector<2x32xf32>
    %152 = arith.addf %150, %151 : vector<2x32xf32>
    %153 = math.tanh %152 : vector<2x32xf32>
    %154 = arith.mulf %149, %153 : vector<2x32xf32>
    %155 = tpu.concatenate %32, %135 in 1 : vector<2x32xf32>, vector<2x32xf32> -> vector<2x64xf32>
    %c0_76 = arith.constant 0 : index
    %c0_77 = arith.constant 0 : index
    %156 = vector.load %arg2[%c0_76, %c0_77] : memref<64x128xf32, #tpu.memory_space<vmem>>, vector<64x128xf32>
    %cst_78 = arith.constant dense<0.000000e+00> : vector<2x128xf32>
    %157 = tpu.matmul %155, %156, %cst_78 {dimension_numbers = #tpu.dot_dimension_numbers<[1], [0], [0], [1], [0, 0, 1, 1], [], []>} : vector<2x64xf32>, vector<64x128xf32>, vector<2x128xf32> -> vector<2x128xf32>
    %158 = arith.addf %157, %2 : vector<2x128xf32>
    %159 = arith.negf %158 : vector<2x128xf32>
    %160 = math.exp %159 : vector<2x128xf32>
    %cst_79 = arith.constant 1.000000e+00 : f32
    %161 = vector.broadcast %cst_79 : f32 to vector<2x128xf32>
    %162 = arith.addf %161, %160 : vector<2x128xf32>
    %163 = arith.divf %161, %162 : vector<2x128xf32>
    %164 = math.tanh %158 : vector<2x128xf32>
    %165 = vector.extract_strided_slice %163 {offsets = [0, 0], sizes = [2, 32], strides = [1, 1]} : vector<2x128xf32> to vector<2x32xf32>
    %166 = vector.extract_strided_slice %163 {offsets = [0, 32], sizes = [2, 32], strides = [1, 1]} : vector<2x128xf32> to vector<2x32xf32>
    %167 = vector.extract_strided_slice %164 {offsets = [0, 64], sizes = [2, 32], strides = [1, 1]} : vector<2x128xf32> to vector<2x32xf32>
    %168 = vector.extract_strided_slice %163 {offsets = [0, 96], sizes = [2, 32], strides = [1, 1]} : vector<2x128xf32> to vector<2x32xf32>
    %169 = arith.mulf %166, %133 : vector<2x32xf32>
    %170 = arith.mulf %165, %167 : vector<2x32xf32>
    %171 = arith.addf %169, %170 : vector<2x32xf32>
    %172 = math.tanh %171 : vector<2x32xf32>
    %173 = arith.mulf %168, %172 : vector<2x32xf32>
    %174 = tpu.concatenate %59, %154 in 1 : vector<2x32xf32>, vector<2x32xf32> -> vector<2x64xf32>
    %c0_80 = arith.constant 0 : index
    %c0_81 = arith.constant 0 : index
    %175 = vector.load %arg4[%c0_80, %c0_81] : memref<64x128xf32, #tpu.memory_space<vmem>>, vector<64x128xf32>
    %cst_82 = arith.constant dense<0.000000e+00> : vector<2x128xf32>
    %176 = tpu.matmul %174, %175, %cst_82 {dimension_numbers = #tpu.dot_dimension_numbers<[1], [0], [0], [1], [0, 0, 1, 1], [], []>} : vector<2x64xf32>, vector<64x128xf32>, vector<2x128xf32> -> vector<2x128xf32>
    %177 = arith.addf %176, %5 : vector<2x128xf32>
    %178 = arith.negf %177 : vector<2x128xf32>
    %179 = math.exp %178 : vector<2x128xf32>
    %cst_83 = arith.constant 1.000000e+00 : f32
    %180 = vector.broadcast %cst_83 : f32 to vector<2x128xf32>
    %181 = arith.addf %180, %179 : vector<2x128xf32>
    %182 = arith.divf %180, %181 : vector<2x128xf32>
    %183 = math.tanh %177 : vector<2x128xf32>
    %184 = vector.extract_strided_slice %182 {offsets = [0, 0], sizes = [2, 32], strides = [1, 1]} : vector<2x128xf32> to vector<2x32xf32>
    %185 = vector.extract_strided_slice %182 {offsets = [0, 32], sizes = [2, 32], strides = [1, 1]} : vector<2x128xf32> to vector<2x32xf32>
    %186 = vector.extract_strided_slice %183 {offsets = [0, 64], sizes = [2, 32], strides = [1, 1]} : vector<2x128xf32> to vector<2x32xf32>
    %187 = vector.extract_strided_slice %182 {offsets = [0, 96], sizes = [2, 32], strides = [1, 1]} : vector<2x128xf32> to vector<2x32xf32>
    %188 = arith.mulf %185, %152 : vector<2x32xf32>
    %189 = arith.mulf %184, %186 : vector<2x32xf32>
    %190 = arith.addf %188, %189 : vector<2x32xf32>
    %191 = math.tanh %190 : vector<2x32xf32>
    %192 = arith.mulf %187, %191 : vector<2x32xf32>
    %193 = tpu.concatenate %41, %173 in 1 : vector<2x32xf32>, vector<2x32xf32> -> vector<2x64xf32>
    %c0_84 = arith.constant 0 : index
    %c0_85 = arith.constant 0 : index
    %194 = vector.load %arg2[%c0_84, %c0_85] : memref<64x128xf32, #tpu.memory_space<vmem>>, vector<64x128xf32>
    %cst_86 = arith.constant dense<0.000000e+00> : vector<2x128xf32>
    %195 = tpu.matmul %193, %194, %cst_86 {dimension_numbers = #tpu.dot_dimension_numbers<[1], [0], [0], [1], [0, 0, 1, 1], [], []>} : vector<2x64xf32>, vector<64x128xf32>, vector<2x128xf32> -> vector<2x128xf32>
    %196 = arith.addf %195, %2 : vector<2x128xf32>
    %197 = arith.negf %196 : vector<2x128xf32>
    %198 = math.exp %197 : vector<2x128xf32>
    %cst_87 = arith.constant 1.000000e+00 : f32
    %199 = vector.broadcast %cst_87 : f32 to vector<2x128xf32>
    %200 = arith.addf %199, %198 : vector<2x128xf32>
    %201 = arith.divf %199, %200 : vector<2x128xf32>
    %202 = math.tanh %196 : vector<2x128xf32>
    %203 = vector.extract_strided_slice %201 {offsets = [0, 0], sizes = [2, 32], strides = [1, 1]} : vector<2x128xf32> to vector<2x32xf32>
    %204 = vector.extract_strided_slice %201 {offsets = [0, 32], sizes = [2, 32], strides = [1, 1]} : vector<2x128xf32> to vector<2x32xf32>
    %205 = vector.extract_strided_slice %202 {offsets = [0, 64], sizes = [2, 32], strides = [1, 1]} : vector<2x128xf32> to vector<2x32xf32>
    %206 = vector.extract_strided_slice %201 {offsets = [0, 96], sizes = [2, 32], strides = [1, 1]} : vector<2x128xf32> to vector<2x32xf32>
    %207 = arith.mulf %204, %171 : vector<2x32xf32>
    %208 = arith.mulf %203, %205 : vector<2x32xf32>
    %209 = arith.addf %207, %208 : vector<2x32xf32>
    %210 = math.tanh %209 : vector<2x32xf32>
    %211 = arith.mulf %206, %210 : vector<2x32xf32>
    %212 = tpu.concatenate %50, %192 in 1 : vector<2x32xf32>, vector<2x32xf32> -> vector<2x64xf32>
    %c0_88 = arith.constant 0 : index
    %c0_89 = arith.constant 0 : index
    %213 = vector.load %arg4[%c0_88, %c0_89] : memref<64x128xf32, #tpu.memory_space<vmem>>, vector<64x128xf32>
    %cst_90 = arith.constant dense<0.000000e+00> : vector<2x128xf32>
    %214 = tpu.matmul %212, %213, %cst_90 {dimension_numbers = #tpu.dot_dimension_numbers<[1], [0], [0], [1], [0, 0, 1, 1], [], []>} : vector<2x64xf32>, vector<64x128xf32>, vector<2x128xf32> -> vector<2x128xf32>
    %215 = arith.addf %214, %5 : vector<2x128xf32>
    %216 = arith.negf %215 : vector<2x128xf32>
    %217 = math.exp %216 : vector<2x128xf32>
    %cst_91 = arith.constant 1.000000e+00 : f32
    %218 = vector.broadcast %cst_91 : f32 to vector<2x128xf32>
    %219 = arith.addf %218, %217 : vector<2x128xf32>
    %220 = arith.divf %218, %219 : vector<2x128xf32>
    %221 = math.tanh %215 : vector<2x128xf32>
    %222 = vector.extract_strided_slice %220 {offsets = [0, 0], sizes = [2, 32], strides = [1, 1]} : vector<2x128xf32> to vector<2x32xf32>
    %223 = vector.extract_strided_slice %220 {offsets = [0, 32], sizes = [2, 32], strides = [1, 1]} : vector<2x128xf32> to vector<2x32xf32>
    %224 = vector.extract_strided_slice %221 {offsets = [0, 64], sizes = [2, 32], strides = [1, 1]} : vector<2x128xf32> to vector<2x32xf32>
    %225 = vector.extract_strided_slice %220 {offsets = [0, 96], sizes = [2, 32], strides = [1, 1]} : vector<2x128xf32> to vector<2x32xf32>
    %226 = arith.mulf %223, %190 : vector<2x32xf32>
    %227 = arith.mulf %222, %224 : vector<2x32xf32>
    %228 = arith.addf %226, %227 : vector<2x32xf32>
    %229 = math.tanh %228 : vector<2x32xf32>
    %230 = arith.mulf %225, %229 : vector<2x32xf32>
    %231 = tpu.concatenate %50, %211 in 1 : vector<2x32xf32>, vector<2x32xf32> -> vector<2x64xf32>
    %c0_92 = arith.constant 0 : index
    %c0_93 = arith.constant 0 : index
    %232 = vector.load %arg2[%c0_92, %c0_93] : memref<64x128xf32, #tpu.memory_space<vmem>>, vector<64x128xf32>
    %cst_94 = arith.constant dense<0.000000e+00> : vector<2x128xf32>
    %233 = tpu.matmul %231, %232, %cst_94 {dimension_numbers = #tpu.dot_dimension_numbers<[1], [0], [0], [1], [0, 0, 1, 1], [], []>} : vector<2x64xf32>, vector<64x128xf32>, vector<2x128xf32> -> vector<2x128xf32>
    %234 = arith.addf %233, %2 : vector<2x128xf32>
    %235 = arith.negf %234 : vector<2x128xf32>
    %236 = math.exp %235 : vector<2x128xf32>
    %cst_95 = arith.constant 1.000000e+00 : f32
    %237 = vector.broadcast %cst_95 : f32 to vector<2x128xf32>
    %238 = arith.addf %237, %236 : vector<2x128xf32>
    %239 = arith.divf %237, %238 : vector<2x128xf32>
    %240 = math.tanh %234 : vector<2x128xf32>
    %241 = vector.extract_strided_slice %239 {offsets = [0, 0], sizes = [2, 32], strides = [1, 1]} : vector<2x128xf32> to vector<2x32xf32>
    %242 = vector.extract_strided_slice %239 {offsets = [0, 32], sizes = [2, 32], strides = [1, 1]} : vector<2x128xf32> to vector<2x32xf32>
    %243 = vector.extract_strided_slice %240 {offsets = [0, 64], sizes = [2, 32], strides = [1, 1]} : vector<2x128xf32> to vector<2x32xf32>
    %244 = vector.extract_strided_slice %239 {offsets = [0, 96], sizes = [2, 32], strides = [1, 1]} : vector<2x128xf32> to vector<2x32xf32>
    %245 = arith.mulf %242, %209 : vector<2x32xf32>
    %246 = arith.mulf %241, %243 : vector<2x32xf32>
    %247 = arith.addf %245, %246 : vector<2x32xf32>
    %248 = math.tanh %247 : vector<2x32xf32>
    %249 = arith.mulf %244, %248 : vector<2x32xf32>
    %250 = tpu.concatenate %41, %230 in 1 : vector<2x32xf32>, vector<2x32xf32> -> vector<2x64xf32>
    %c0_96 = arith.constant 0 : index
    %c0_97 = arith.constant 0 : index
    %251 = vector.load %arg4[%c0_96, %c0_97] : memref<64x128xf32, #tpu.memory_space<vmem>>, vector<64x128xf32>
    %cst_98 = arith.constant dense<0.000000e+00> : vector<2x128xf32>
    %252 = tpu.matmul %250, %251, %cst_98 {dimension_numbers = #tpu.dot_dimension_numbers<[1], [0], [0], [1], [0, 0, 1, 1], [], []>} : vector<2x64xf32>, vector<64x128xf32>, vector<2x128xf32> -> vector<2x128xf32>
    %253 = arith.addf %252, %5 : vector<2x128xf32>
    %254 = arith.negf %253 : vector<2x128xf32>
    %255 = math.exp %254 : vector<2x128xf32>
    %cst_99 = arith.constant 1.000000e+00 : f32
    %256 = vector.broadcast %cst_99 : f32 to vector<2x128xf32>
    %257 = arith.addf %256, %255 : vector<2x128xf32>
    %258 = arith.divf %256, %257 : vector<2x128xf32>
    %259 = math.tanh %253 : vector<2x128xf32>
    %260 = vector.extract_strided_slice %258 {offsets = [0, 0], sizes = [2, 32], strides = [1, 1]} : vector<2x128xf32> to vector<2x32xf32>
    %261 = vector.extract_strided_slice %258 {offsets = [0, 32], sizes = [2, 32], strides = [1, 1]} : vector<2x128xf32> to vector<2x32xf32>
    %262 = vector.extract_strided_slice %259 {offsets = [0, 64], sizes = [2, 32], strides = [1, 1]} : vector<2x128xf32> to vector<2x32xf32>
    %263 = vector.extract_strided_slice %258 {offsets = [0, 96], sizes = [2, 32], strides = [1, 1]} : vector<2x128xf32> to vector<2x32xf32>
    %264 = arith.mulf %261, %228 : vector<2x32xf32>
    %265 = arith.mulf %260, %262 : vector<2x32xf32>
    %266 = arith.addf %264, %265 : vector<2x32xf32>
    %267 = math.tanh %266 : vector<2x32xf32>
    %268 = arith.mulf %263, %267 : vector<2x32xf32>
    %269 = tpu.concatenate %59, %249 in 1 : vector<2x32xf32>, vector<2x32xf32> -> vector<2x64xf32>
    %c0_100 = arith.constant 0 : index
    %c0_101 = arith.constant 0 : index
    %270 = vector.load %arg2[%c0_100, %c0_101] : memref<64x128xf32, #tpu.memory_space<vmem>>, vector<64x128xf32>
    %cst_102 = arith.constant dense<0.000000e+00> : vector<2x128xf32>
    %271 = tpu.matmul %269, %270, %cst_102 {dimension_numbers = #tpu.dot_dimension_numbers<[1], [0], [0], [1], [0, 0, 1, 1], [], []>} : vector<2x64xf32>, vector<64x128xf32>, vector<2x128xf32> -> vector<2x128xf32>
    %272 = arith.addf %271, %2 : vector<2x128xf32>
    %273 = arith.negf %272 : vector<2x128xf32>
    %274 = math.exp %273 : vector<2x128xf32>
    %cst_103 = arith.constant 1.000000e+00 : f32
    %275 = vector.broadcast %cst_103 : f32 to vector<2x128xf32>
    %276 = arith.addf %275, %274 : vector<2x128xf32>
    %277 = arith.divf %275, %276 : vector<2x128xf32>
    %278 = math.tanh %272 : vector<2x128xf32>
    %279 = vector.extract_strided_slice %277 {offsets = [0, 0], sizes = [2, 32], strides = [1, 1]} : vector<2x128xf32> to vector<2x32xf32>
    %280 = vector.extract_strided_slice %277 {offsets = [0, 32], sizes = [2, 32], strides = [1, 1]} : vector<2x128xf32> to vector<2x32xf32>
    %281 = vector.extract_strided_slice %278 {offsets = [0, 64], sizes = [2, 32], strides = [1, 1]} : vector<2x128xf32> to vector<2x32xf32>
    %282 = vector.extract_strided_slice %277 {offsets = [0, 96], sizes = [2, 32], strides = [1, 1]} : vector<2x128xf32> to vector<2x32xf32>
    %283 = arith.mulf %280, %247 : vector<2x32xf32>
    %284 = arith.mulf %279, %281 : vector<2x32xf32>
    %285 = arith.addf %283, %284 : vector<2x32xf32>
    %286 = math.tanh %285 : vector<2x32xf32>
    %287 = arith.mulf %282, %286 : vector<2x32xf32>
    %288 = tpu.concatenate %32, %268 in 1 : vector<2x32xf32>, vector<2x32xf32> -> vector<2x64xf32>
    %c0_104 = arith.constant 0 : index
    %c0_105 = arith.constant 0 : index
    %289 = vector.load %arg4[%c0_104, %c0_105] : memref<64x128xf32, #tpu.memory_space<vmem>>, vector<64x128xf32>
    %cst_106 = arith.constant dense<0.000000e+00> : vector<2x128xf32>
    %290 = tpu.matmul %288, %289, %cst_106 {dimension_numbers = #tpu.dot_dimension_numbers<[1], [0], [0], [1], [0, 0, 1, 1], [], []>} : vector<2x64xf32>, vector<64x128xf32>, vector<2x128xf32> -> vector<2x128xf32>
    %291 = arith.addf %290, %5 : vector<2x128xf32>
    %292 = arith.negf %291 : vector<2x128xf32>
    %293 = math.exp %292 : vector<2x128xf32>
    %cst_107 = arith.constant 1.000000e+00 : f32
    %294 = vector.broadcast %cst_107 : f32 to vector<2x128xf32>
    %295 = arith.addf %294, %293 : vector<2x128xf32>
    %296 = arith.divf %294, %295 : vector<2x128xf32>
    %297 = math.tanh %291 : vector<2x128xf32>
    %298 = vector.extract_strided_slice %296 {offsets = [0, 0], sizes = [2, 32], strides = [1, 1]} : vector<2x128xf32> to vector<2x32xf32>
    %299 = vector.extract_strided_slice %296 {offsets = [0, 32], sizes = [2, 32], strides = [1, 1]} : vector<2x128xf32> to vector<2x32xf32>
    %300 = vector.extract_strided_slice %297 {offsets = [0, 64], sizes = [2, 32], strides = [1, 1]} : vector<2x128xf32> to vector<2x32xf32>
    %301 = vector.extract_strided_slice %296 {offsets = [0, 96], sizes = [2, 32], strides = [1, 1]} : vector<2x128xf32> to vector<2x32xf32>
    %302 = arith.mulf %299, %266 : vector<2x32xf32>
    %303 = arith.mulf %298, %300 : vector<2x32xf32>
    %304 = arith.addf %302, %303 : vector<2x32xf32>
    %305 = math.tanh %304 : vector<2x32xf32>
    %306 = arith.mulf %301, %305 : vector<2x32xf32>
    %307 = tpu.concatenate %68, %287 in 1 : vector<2x32xf32>, vector<2x32xf32> -> vector<2x64xf32>
    %c0_108 = arith.constant 0 : index
    %c0_109 = arith.constant 0 : index
    %308 = vector.load %arg2[%c0_108, %c0_109] : memref<64x128xf32, #tpu.memory_space<vmem>>, vector<64x128xf32>
    %cst_110 = arith.constant dense<0.000000e+00> : vector<2x128xf32>
    %309 = tpu.matmul %307, %308, %cst_110 {dimension_numbers = #tpu.dot_dimension_numbers<[1], [0], [0], [1], [0, 0, 1, 1], [], []>} : vector<2x64xf32>, vector<64x128xf32>, vector<2x128xf32> -> vector<2x128xf32>
    %310 = arith.addf %309, %2 : vector<2x128xf32>
    %311 = arith.negf %310 : vector<2x128xf32>
    %312 = math.exp %311 : vector<2x128xf32>
    %cst_111 = arith.constant 1.000000e+00 : f32
    %313 = vector.broadcast %cst_111 : f32 to vector<2x128xf32>
    %314 = arith.addf %313, %312 : vector<2x128xf32>
    %315 = arith.divf %313, %314 : vector<2x128xf32>
    %316 = math.tanh %310 : vector<2x128xf32>
    %317 = vector.extract_strided_slice %315 {offsets = [0, 0], sizes = [2, 32], strides = [1, 1]} : vector<2x128xf32> to vector<2x32xf32>
    %318 = vector.extract_strided_slice %315 {offsets = [0, 32], sizes = [2, 32], strides = [1, 1]} : vector<2x128xf32> to vector<2x32xf32>
    %319 = vector.extract_strided_slice %316 {offsets = [0, 64], sizes = [2, 32], strides = [1, 1]} : vector<2x128xf32> to vector<2x32xf32>
    %320 = vector.extract_strided_slice %315 {offsets = [0, 96], sizes = [2, 32], strides = [1, 1]} : vector<2x128xf32> to vector<2x32xf32>
    %321 = arith.mulf %318, %285 : vector<2x32xf32>
    %322 = arith.mulf %317, %319 : vector<2x32xf32>
    %323 = arith.addf %321, %322 : vector<2x32xf32>
    %324 = math.tanh %323 : vector<2x32xf32>
    %325 = arith.mulf %320, %324 : vector<2x32xf32>
    %326 = tpu.concatenate %23, %306 in 1 : vector<2x32xf32>, vector<2x32xf32> -> vector<2x64xf32>
    %c0_112 = arith.constant 0 : index
    %c0_113 = arith.constant 0 : index
    %327 = vector.load %arg4[%c0_112, %c0_113] : memref<64x128xf32, #tpu.memory_space<vmem>>, vector<64x128xf32>
    %cst_114 = arith.constant dense<0.000000e+00> : vector<2x128xf32>
    %328 = tpu.matmul %326, %327, %cst_114 {dimension_numbers = #tpu.dot_dimension_numbers<[1], [0], [0], [1], [0, 0, 1, 1], [], []>} : vector<2x64xf32>, vector<64x128xf32>, vector<2x128xf32> -> vector<2x128xf32>
    %329 = arith.addf %328, %5 : vector<2x128xf32>
    %330 = arith.negf %329 : vector<2x128xf32>
    %331 = math.exp %330 : vector<2x128xf32>
    %cst_115 = arith.constant 1.000000e+00 : f32
    %332 = vector.broadcast %cst_115 : f32 to vector<2x128xf32>
    %333 = arith.addf %332, %331 : vector<2x128xf32>
    %334 = arith.divf %332, %333 : vector<2x128xf32>
    %335 = math.tanh %329 : vector<2x128xf32>
    %336 = vector.extract_strided_slice %334 {offsets = [0, 0], sizes = [2, 32], strides = [1, 1]} : vector<2x128xf32> to vector<2x32xf32>
    %337 = vector.extract_strided_slice %334 {offsets = [0, 32], sizes = [2, 32], strides = [1, 1]} : vector<2x128xf32> to vector<2x32xf32>
    %338 = vector.extract_strided_slice %335 {offsets = [0, 64], sizes = [2, 32], strides = [1, 1]} : vector<2x128xf32> to vector<2x32xf32>
    %339 = vector.extract_strided_slice %334 {offsets = [0, 96], sizes = [2, 32], strides = [1, 1]} : vector<2x128xf32> to vector<2x32xf32>
    %340 = arith.mulf %337, %304 : vector<2x32xf32>
    %341 = arith.mulf %336, %338 : vector<2x32xf32>
    %342 = arith.addf %340, %341 : vector<2x32xf32>
    %343 = math.tanh %342 : vector<2x32xf32>
    %344 = arith.mulf %339, %343 : vector<2x32xf32>
    %345 = tpu.concatenate %77, %325 in 1 : vector<2x32xf32>, vector<2x32xf32> -> vector<2x64xf32>
    %c0_116 = arith.constant 0 : index
    %c0_117 = arith.constant 0 : index
    %346 = vector.load %arg2[%c0_116, %c0_117] : memref<64x128xf32, #tpu.memory_space<vmem>>, vector<64x128xf32>
    %cst_118 = arith.constant dense<0.000000e+00> : vector<2x128xf32>
    %347 = tpu.matmul %345, %346, %cst_118 {dimension_numbers = #tpu.dot_dimension_numbers<[1], [0], [0], [1], [0, 0, 1, 1], [], []>} : vector<2x64xf32>, vector<64x128xf32>, vector<2x128xf32> -> vector<2x128xf32>
    %348 = arith.addf %347, %2 : vector<2x128xf32>
    %349 = arith.negf %348 : vector<2x128xf32>
    %350 = math.exp %349 : vector<2x128xf32>
    %cst_119 = arith.constant 1.000000e+00 : f32
    %351 = vector.broadcast %cst_119 : f32 to vector<2x128xf32>
    %352 = arith.addf %351, %350 : vector<2x128xf32>
    %353 = arith.divf %351, %352 : vector<2x128xf32>
    %354 = math.tanh %348 : vector<2x128xf32>
    %355 = vector.extract_strided_slice %353 {offsets = [0, 0], sizes = [2, 32], strides = [1, 1]} : vector<2x128xf32> to vector<2x32xf32>
    %356 = vector.extract_strided_slice %353 {offsets = [0, 32], sizes = [2, 32], strides = [1, 1]} : vector<2x128xf32> to vector<2x32xf32>
    %357 = vector.extract_strided_slice %354 {offsets = [0, 64], sizes = [2, 32], strides = [1, 1]} : vector<2x128xf32> to vector<2x32xf32>
    %358 = vector.extract_strided_slice %353 {offsets = [0, 96], sizes = [2, 32], strides = [1, 1]} : vector<2x128xf32> to vector<2x32xf32>
    %359 = arith.mulf %356, %323 : vector<2x32xf32>
    %360 = arith.mulf %355, %357 : vector<2x32xf32>
    %361 = arith.addf %359, %360 : vector<2x32xf32>
    %362 = math.tanh %361 : vector<2x32xf32>
    %363 = arith.mulf %358, %362 : vector<2x32xf32>
    %364 = tpu.concatenate %14, %344 in 1 : vector<2x32xf32>, vector<2x32xf32> -> vector<2x64xf32>
    %c0_120 = arith.constant 0 : index
    %c0_121 = arith.constant 0 : index
    %365 = vector.load %arg4[%c0_120, %c0_121] : memref<64x128xf32, #tpu.memory_space<vmem>>, vector<64x128xf32>
    %cst_122 = arith.constant dense<0.000000e+00> : vector<2x128xf32>
    %366 = tpu.matmul %364, %365, %cst_122 {dimension_numbers = #tpu.dot_dimension_numbers<[1], [0], [0], [1], [0, 0, 1, 1], [], []>} : vector<2x64xf32>, vector<64x128xf32>, vector<2x128xf32> -> vector<2x128xf32>
    %367 = arith.addf %366, %5 : vector<2x128xf32>
    %368 = arith.negf %367 : vector<2x128xf32>
    %369 = math.exp %368 : vector<2x128xf32>
    %cst_123 = arith.constant 1.000000e+00 : f32
    %370 = vector.broadcast %cst_123 : f32 to vector<2x128xf32>
    %371 = arith.addf %370, %369 : vector<2x128xf32>
    %372 = arith.divf %370, %371 : vector<2x128xf32>
    %373 = math.tanh %367 : vector<2x128xf32>
    %374 = vector.extract_strided_slice %372 {offsets = [0, 0], sizes = [2, 32], strides = [1, 1]} : vector<2x128xf32> to vector<2x32xf32>
    %375 = vector.extract_strided_slice %372 {offsets = [0, 32], sizes = [2, 32], strides = [1, 1]} : vector<2x128xf32> to vector<2x32xf32>
    %376 = vector.extract_strided_slice %373 {offsets = [0, 64], sizes = [2, 32], strides = [1, 1]} : vector<2x128xf32> to vector<2x32xf32>
    %377 = vector.extract_strided_slice %372 {offsets = [0, 96], sizes = [2, 32], strides = [1, 1]} : vector<2x128xf32> to vector<2x32xf32>
    %378 = arith.mulf %375, %342 : vector<2x32xf32>
    %379 = arith.mulf %374, %376 : vector<2x32xf32>
    %380 = arith.addf %378, %379 : vector<2x32xf32>
    %381 = math.tanh %380 : vector<2x32xf32>
    %382 = arith.mulf %377, %381 : vector<2x32xf32>
    %383 = vector.extract_strided_slice %363 {offsets = [0, 0], sizes = [1, 32], strides = [1, 1]} : vector<2x32xf32> to vector<1x32xf32>
    %384 = vector.extract_strided_slice %382 {offsets = [0, 0], sizes = [1, 32], strides = [1, 1]} : vector<2x32xf32> to vector<1x32xf32>
    %385 = tpu.concatenate %383, %384 in 0 : vector<1x32xf32>, vector<1x32xf32> -> vector<2x32xf32>
    %386 = vector.extract_strided_slice %363 {offsets = [1, 0], sizes = [1, 32], strides = [1, 1]} : vector<2x32xf32> to vector<1x32xf32>
    %387 = vector.extract_strided_slice %382 {offsets = [1, 0], sizes = [1, 32], strides = [1, 1]} : vector<2x32xf32> to vector<1x32xf32>
    %388 = tpu.concatenate %386, %387 in 0 : vector<1x32xf32>, vector<1x32xf32> -> vector<2x32xf32>
    %389 = arith.mulf %97, %385 : vector<2x32xf32>
    %cst_124 = arith.constant dense<0.000000e+00> : vector<2xf32>
    %390 = vector.multi_reduction <add>, %389, %cst_124 [1] : vector<2x32xf32> to vector<2xf32>
    %391 = vector.shape_cast %390 : vector<2xf32> to vector<2x1xf32>
    %392 = arith.mulf %382, %388 : vector<2x32xf32>
    %cst_125 = arith.constant dense<0.000000e+00> : vector<2xf32>
    %393 = vector.multi_reduction <add>, %392, %cst_125 [1] : vector<2x32xf32> to vector<2xf32>
    %394 = vector.shape_cast %393 : vector<2xf32> to vector<2x1xf32>
    %395 = arith.addf %391, %394 : vector<2x1xf32>
    %396 = arith.mulf %135, %385 : vector<2x32xf32>
    %cst_126 = arith.constant dense<0.000000e+00> : vector<2xf32>
    %397 = vector.multi_reduction <add>, %396, %cst_126 [1] : vector<2x32xf32> to vector<2xf32>
    %398 = vector.shape_cast %397 : vector<2xf32> to vector<2x1xf32>
    %399 = arith.mulf %344, %388 : vector<2x32xf32>
    %cst_127 = arith.constant dense<0.000000e+00> : vector<2xf32>
    %400 = vector.multi_reduction <add>, %399, %cst_127 [1] : vector<2x32xf32> to vector<2xf32>
    %401 = vector.shape_cast %400 : vector<2xf32> to vector<2x1xf32>
    %402 = arith.addf %398, %401 : vector<2x1xf32>
    %403 = arith.mulf %173, %385 : vector<2x32xf32>
    %cst_128 = arith.constant dense<0.000000e+00> : vector<2xf32>
    %404 = vector.multi_reduction <add>, %403, %cst_128 [1] : vector<2x32xf32> to vector<2xf32>
    %405 = vector.shape_cast %404 : vector<2xf32> to vector<2x1xf32>
    %406 = arith.mulf %306, %388 : vector<2x32xf32>
    %cst_129 = arith.constant dense<0.000000e+00> : vector<2xf32>
    %407 = vector.multi_reduction <add>, %406, %cst_129 [1] : vector<2x32xf32> to vector<2xf32>
    %408 = vector.shape_cast %407 : vector<2xf32> to vector<2x1xf32>
    %409 = arith.addf %405, %408 : vector<2x1xf32>
    %410 = arith.mulf %211, %385 : vector<2x32xf32>
    %cst_130 = arith.constant dense<0.000000e+00> : vector<2xf32>
    %411 = vector.multi_reduction <add>, %410, %cst_130 [1] : vector<2x32xf32> to vector<2xf32>
    %412 = vector.shape_cast %411 : vector<2xf32> to vector<2x1xf32>
    %413 = arith.mulf %268, %388 : vector<2x32xf32>
    %cst_131 = arith.constant dense<0.000000e+00> : vector<2xf32>
    %414 = vector.multi_reduction <add>, %413, %cst_131 [1] : vector<2x32xf32> to vector<2xf32>
    %415 = vector.shape_cast %414 : vector<2xf32> to vector<2x1xf32>
    %416 = arith.addf %412, %415 : vector<2x1xf32>
    %417 = arith.mulf %249, %385 : vector<2x32xf32>
    %cst_132 = arith.constant dense<0.000000e+00> : vector<2xf32>
    %418 = vector.multi_reduction <add>, %417, %cst_132 [1] : vector<2x32xf32> to vector<2xf32>
    %419 = vector.shape_cast %418 : vector<2xf32> to vector<2x1xf32>
    %420 = arith.mulf %230, %388 : vector<2x32xf32>
    %cst_133 = arith.constant dense<0.000000e+00> : vector<2xf32>
    %421 = vector.multi_reduction <add>, %420, %cst_133 [1] : vector<2x32xf32> to vector<2xf32>
    %422 = vector.shape_cast %421 : vector<2xf32> to vector<2x1xf32>
    %423 = arith.addf %419, %422 : vector<2x1xf32>
    %424 = arith.mulf %287, %385 : vector<2x32xf32>
    %cst_134 = arith.constant dense<0.000000e+00> : vector<2xf32>
    %425 = vector.multi_reduction <add>, %424, %cst_134 [1] : vector<2x32xf32> to vector<2xf32>
    %426 = vector.shape_cast %425 : vector<2xf32> to vector<2x1xf32>
    %427 = arith.mulf %192, %388 : vector<2x32xf32>
    %cst_135 = arith.constant dense<0.000000e+00> : vector<2xf32>
    %428 = vector.multi_reduction <add>, %427, %cst_135 [1] : vector<2x32xf32> to vector<2xf32>
    %429 = vector.shape_cast %428 : vector<2xf32> to vector<2x1xf32>
    %430 = arith.addf %426, %429 : vector<2x1xf32>
    %431 = arith.mulf %325, %385 : vector<2x32xf32>
    %cst_136 = arith.constant dense<0.000000e+00> : vector<2xf32>
    %432 = vector.multi_reduction <add>, %431, %cst_136 [1] : vector<2x32xf32> to vector<2xf32>
    %433 = vector.shape_cast %432 : vector<2xf32> to vector<2x1xf32>
    %434 = arith.mulf %154, %388 : vector<2x32xf32>
    %cst_137 = arith.constant dense<0.000000e+00> : vector<2xf32>
    %435 = vector.multi_reduction <add>, %434, %cst_137 [1] : vector<2x32xf32> to vector<2xf32>
    %436 = vector.shape_cast %435 : vector<2xf32> to vector<2x1xf32>
    %437 = arith.addf %433, %436 : vector<2x1xf32>
    %438 = arith.mulf %363, %385 : vector<2x32xf32>
    %cst_138 = arith.constant dense<0.000000e+00> : vector<2xf32>
    %439 = vector.multi_reduction <add>, %438, %cst_138 [1] : vector<2x32xf32> to vector<2xf32>
    %440 = vector.shape_cast %439 : vector<2xf32> to vector<2x1xf32>
    %441 = arith.mulf %116, %388 : vector<2x32xf32>
    %cst_139 = arith.constant dense<0.000000e+00> : vector<2xf32>
    %442 = vector.multi_reduction <add>, %441, %cst_139 [1] : vector<2x32xf32> to vector<2xf32>
    %443 = vector.shape_cast %442 : vector<2xf32> to vector<2x1xf32>
    %444 = arith.addf %440, %443 : vector<2x1xf32>
    %445 = tpu.concatenate %395, %402, %409, %416, %423, %430, %437, %444 in 1 : vector<2x1xf32>, vector<2x1xf32>, vector<2x1xf32>, vector<2x1xf32>, vector<2x1xf32>, vector<2x1xf32>, vector<2x1xf32>, vector<2x1xf32> -> vector<2x8xf32>
    %cst_140 = arith.constant dense<0xFF800000> : vector<2xf32>
    %446 = vector.multi_reduction <maximumf>, %445, %cst_140 [1] : vector<2x8xf32> to vector<2xf32>
    %447 = vector.shape_cast %446 : vector<2xf32> to vector<2x1xf32>
    %448 = vector.broadcast %447 : vector<2x1xf32> to vector<2x8xf32>
    %449 = arith.subf %445, %448 : vector<2x8xf32>
    %450 = math.exp %449 : vector<2x8xf32>
    %cst_141 = arith.constant dense<0.000000e+00> : vector<2xf32>
    %451 = vector.multi_reduction <add>, %450, %cst_141 [1] : vector<2x8xf32> to vector<2xf32>
    %452 = vector.shape_cast %451 : vector<2xf32> to vector<2x1xf32>
    %453 = vector.broadcast %452 : vector<2x1xf32> to vector<2x8xf32>
    %454 = arith.divf %450, %453 : vector<2x8xf32>
    %455 = vector.extract_strided_slice %454 {offsets = [0, 0], sizes = [2, 1], strides = [1, 1]} : vector<2x8xf32> to vector<2x1xf32>
    %456 = vector.broadcast %455 : vector<2x1xf32> to vector<2x32xf32>
    %457 = arith.mulf %456, %97 : vector<2x32xf32>
    %458 = arith.addf %78, %457 : vector<2x32xf32>
    %459 = vector.extract_strided_slice %454 {offsets = [0, 0], sizes = [2, 1], strides = [1, 1]} : vector<2x8xf32> to vector<2x1xf32>
    %460 = vector.broadcast %459 : vector<2x1xf32> to vector<2x32xf32>
    %461 = arith.mulf %460, %382 : vector<2x32xf32>
    %462 = arith.addf %78, %461 : vector<2x32xf32>
    %463 = vector.extract_strided_slice %454 {offsets = [0, 1], sizes = [2, 1], strides = [1, 1]} : vector<2x8xf32> to vector<2x1xf32>
    %464 = vector.broadcast %463 : vector<2x1xf32> to vector<2x32xf32>
    %465 = arith.mulf %464, %135 : vector<2x32xf32>
    %466 = arith.addf %458, %465 : vector<2x32xf32>
    %467 = vector.extract_strided_slice %454 {offsets = [0, 1], sizes = [2, 1], strides = [1, 1]} : vector<2x8xf32> to vector<2x1xf32>
    %468 = vector.broadcast %467 : vector<2x1xf32> to vector<2x32xf32>
    %469 = arith.mulf %468, %344 : vector<2x32xf32>
    %470 = arith.addf %462, %469 : vector<2x32xf32>
    %471 = vector.extract_strided_slice %454 {offsets = [0, 2], sizes = [2, 1], strides = [1, 1]} : vector<2x8xf32> to vector<2x1xf32>
    %472 = vector.broadcast %471 : vector<2x1xf32> to vector<2x32xf32>
    %473 = arith.mulf %472, %173 : vector<2x32xf32>
    %474 = arith.addf %466, %473 : vector<2x32xf32>
    %475 = vector.extract_strided_slice %454 {offsets = [0, 2], sizes = [2, 1], strides = [1, 1]} : vector<2x8xf32> to vector<2x1xf32>
    %476 = vector.broadcast %475 : vector<2x1xf32> to vector<2x32xf32>
    %477 = arith.mulf %476, %306 : vector<2x32xf32>
    %478 = arith.addf %470, %477 : vector<2x32xf32>
    %479 = vector.extract_strided_slice %454 {offsets = [0, 3], sizes = [2, 1], strides = [1, 1]} : vector<2x8xf32> to vector<2x1xf32>
    %480 = vector.broadcast %479 : vector<2x1xf32> to vector<2x32xf32>
    %481 = arith.mulf %480, %211 : vector<2x32xf32>
    %482 = arith.addf %474, %481 : vector<2x32xf32>
    %483 = vector.extract_strided_slice %454 {offsets = [0, 3], sizes = [2, 1], strides = [1, 1]} : vector<2x8xf32> to vector<2x1xf32>
    %484 = vector.broadcast %483 : vector<2x1xf32> to vector<2x32xf32>
    %485 = arith.mulf %484, %268 : vector<2x32xf32>
    %486 = arith.addf %478, %485 : vector<2x32xf32>
    %487 = vector.extract_strided_slice %454 {offsets = [0, 4], sizes = [2, 1], strides = [1, 1]} : vector<2x8xf32> to vector<2x1xf32>
    %488 = vector.broadcast %487 : vector<2x1xf32> to vector<2x32xf32>
    %489 = arith.mulf %488, %249 : vector<2x32xf32>
    %490 = arith.addf %482, %489 : vector<2x32xf32>
    %491 = vector.extract_strided_slice %454 {offsets = [0, 4], sizes = [2, 1], strides = [1, 1]} : vector<2x8xf32> to vector<2x1xf32>
    %492 = vector.broadcast %491 : vector<2x1xf32> to vector<2x32xf32>
    %493 = arith.mulf %492, %230 : vector<2x32xf32>
    %494 = arith.addf %486, %493 : vector<2x32xf32>
    %495 = vector.extract_strided_slice %454 {offsets = [0, 5], sizes = [2, 1], strides = [1, 1]} : vector<2x8xf32> to vector<2x1xf32>
    %496 = vector.broadcast %495 : vector<2x1xf32> to vector<2x32xf32>
    %497 = arith.mulf %496, %287 : vector<2x32xf32>
    %498 = arith.addf %490, %497 : vector<2x32xf32>
    %499 = vector.extract_strided_slice %454 {offsets = [0, 5], sizes = [2, 1], strides = [1, 1]} : vector<2x8xf32> to vector<2x1xf32>
    %500 = vector.broadcast %499 : vector<2x1xf32> to vector<2x32xf32>
    %501 = arith.mulf %500, %192 : vector<2x32xf32>
    %502 = arith.addf %494, %501 : vector<2x32xf32>
    %503 = vector.extract_strided_slice %454 {offsets = [0, 6], sizes = [2, 1], strides = [1, 1]} : vector<2x8xf32> to vector<2x1xf32>
    %504 = vector.broadcast %503 : vector<2x1xf32> to vector<2x32xf32>
    %505 = arith.mulf %504, %325 : vector<2x32xf32>
    %506 = arith.addf %498, %505 : vector<2x32xf32>
    %507 = vector.extract_strided_slice %454 {offsets = [0, 6], sizes = [2, 1], strides = [1, 1]} : vector<2x8xf32> to vector<2x1xf32>
    %508 = vector.broadcast %507 : vector<2x1xf32> to vector<2x32xf32>
    %509 = arith.mulf %508, %154 : vector<2x32xf32>
    %510 = arith.addf %502, %509 : vector<2x32xf32>
    %511 = vector.extract_strided_slice %454 {offsets = [0, 7], sizes = [2, 1], strides = [1, 1]} : vector<2x8xf32> to vector<2x1xf32>
    %512 = vector.broadcast %511 : vector<2x1xf32> to vector<2x32xf32>
    %513 = arith.mulf %512, %363 : vector<2x32xf32>
    %514 = arith.addf %506, %513 : vector<2x32xf32>
    %515 = vector.extract_strided_slice %454 {offsets = [0, 7], sizes = [2, 1], strides = [1, 1]} : vector<2x8xf32> to vector<2x1xf32>
    %516 = vector.broadcast %515 : vector<2x1xf32> to vector<2x32xf32>
    %517 = arith.mulf %516, %116 : vector<2x32xf32>
    %518 = arith.addf %510, %517 : vector<2x32xf32>
    %519 = tpu.concatenate %514, %518 in 1 : vector<2x32xf32>, vector<2x32xf32> -> vector<2x64xf32>
    %c0_142 = arith.constant 0 : index
    %c0_143 = arith.constant 0 : index
    %520 = vector.load %arg6[%c0_142, %c0_143] : memref<64x32xf32, #tpu.memory_space<vmem>>, vector<64x32xf32>
    %cst_144 = arith.constant dense<0.000000e+00> : vector<2x32xf32>
    %521 = tpu.matmul %519, %520, %cst_144 {dimension_numbers = #tpu.dot_dimension_numbers<[1], [0], [0], [1], [0, 0, 1, 1], [], []>} : vector<2x64xf32>, vector<64x32xf32>, vector<2x32xf32> -> vector<2x32xf32>
    %c0_145 = arith.constant 0 : index
    %c0_146 = arith.constant 0 : index
    %522 = vector.load %arg7[%c0_145, %c0_146] : memref<1x32xf32, #tpu.memory_space<vmem>>, vector<1x32xf32>
    %523 = vector.broadcast %522 : vector<1x32xf32> to vector<2x32xf32>
    %524 = arith.addf %521, %523 : vector<2x32xf32>
    %c0_147 = arith.constant 0 : index
    %c0_148 = arith.constant 0 : index
    %525 = vector.load %arg8[%c0_147, %c0_148] : memref<32x8xf32, #tpu.memory_space<vmem>>, vector<32x8xf32>
    %cst_149 = arith.constant dense<0.000000e+00> : vector<2x8xf32>
    %526 = tpu.matmul %524, %525, %cst_149 {dimension_numbers = #tpu.dot_dimension_numbers<[1], [0], [0], [1], [0, 0, 1, 1], [], []>} : vector<2x32xf32>, vector<32x8xf32>, vector<2x8xf32> -> vector<2x8xf32>
    %c0_150 = arith.constant 0 : index
    %c0_151 = arith.constant 0 : index
    %527 = vector.load %arg9[%c0_150, %c0_151] : memref<1x8xf32, #tpu.memory_space<vmem>>, vector<1x8xf32>
    %528 = vector.broadcast %527 : vector<1x8xf32> to vector<2x8xf32>
    %529 = arith.addf %526, %528 : vector<2x8xf32>
    %c0_152 = arith.constant 0 : index
    %c0_153 = arith.constant 0 : index
    %530 = vector.load %arg10[%c0_152, %c0_153] : memref<2x8xf32, #tpu.memory_space<vmem>>, vector<2x8xf32>
    tpu.vector_store %arg10[%c0_152, %c0_153], %529 {strides = array<i32>} : memref<2x8xf32, #tpu.memory_space<vmem>>, vector<2x8xf32>,
    return
  }
}

</mosaic_0001>

<llo_original>
// kernel: att_lstm_forward.1
$region0: #{att_lstm_forward.1}
  #allocation0 [shape = 'u32[]', space=smem, size = 0x4, offset = 0x4, fixed_abs, tag = 'smem constant byte address 0x4 - core index']
  #allocation1 [shape = 'u32[144,128]{1,0:T(1,128)}', space=vmem, size = 0x12000, scoped, tag = 'internal scratch']
  %s0 = inlined_call_operand.vmem [shape: s32[8,2], index: 0, kind: input, shape index: {}]
  %s1 = inlined_call_operand.vmem [shape: f32[64,1,32], index: 1, kind: input, shape index: {}]
  %s2 = inlined_call_operand.vmem [shape: f32[64,128], index: 2, kind: input, shape index: {}]
  %s3 = inlined_call_operand.vmem [shape: f32[1,128], index: 3, kind: input, shape index: {}]
  %s4 = inlined_call_operand.vmem [shape: f32[64,128], index: 4, kind: input, shape index: {}]
  %s5 = inlined_call_operand.vmem [shape: f32[1,128], index: 5, kind: input, shape index: {}]
  %s6 = inlined_call_operand.vmem [shape: f32[64,32], index: 6, kind: input, shape index: {}]
  %s7 = inlined_call_operand.vmem [shape: f32[1,32], index: 7, kind: input, shape index: {}]
  %s8 = inlined_call_operand.vmem [shape: f32[32,8], index: 8, kind: input, shape index: {}]
  %s9 = inlined_call_operand.vmem [shape: f32[1,8], index: 9, kind: input, shape index: {}]
  %s10 = inlined_call_operand.hbm [shape: f32[2,8], index: 10, kind: output, shape index: {}]
  %s11 = sld [smem:[#allocation0]]
  $region54: #{att_lstm_forward.1} parent=0
    _
  %s13 = ssub.s32 1, %s11
  %s14 = scalar_select 0, %s13, %s11
  $region1: #{att_lstm_forward.1} parent=0
    #allocation2 [shape = 'u8[4096]{0}', space=smem, size = 0x1000, scoped, tag = 'input window, operand 0, single buffered']
    #allocation3 [shape = 's32[1]{0}', space=sflag, size = 0x4, scoped, tag = 'scoped memory for att_lstm_forward.1']
    #allocation4 [shape = 's32[1]{0}', space=sflag, size = 0x4, scoped, tag = 'scoped memory for att_lstm_forward.1']
    #allocation5 [shape = 'u8[1024]{0}', space=vmem, size = 0x400, scoped, tag = 'output window, operand 0, single buffered']
    %15 = vsyncpa [#allocation4], 0
    %16 = vsyncpa [#allocation3], 0
    // Predicated region
    $region2: #{att_lstm_forward.1} parent=1 // pred_check
      _
    $region3: #{att_lstm_forward.1} parent=1 // pred_check_branch
      %18 = sbr.rel (0) target = $region5
    $region4: #{att_lstm_forward.1} parent=1 // pred_region
      %s20 = ssub.s32 128, 128
      %21 = vsyncadd [#allocation4], %s20
      %s23 = sshll.u32 %s0, 4
      %s24 = int_to_ptr.vmem [resolvable:$true] %s23
      %26 = dma.vmem_to_smem %s24, 128, [#allocation2], [#allocation4]
    $region5: #{att_lstm_forward.1} parent=1 // pred_fallthru
      _
    // Predicated region
    $region6: #{att_lstm_forward.1} parent=1 // pred_check
      _
    $region7: #{att_lstm_forward.1} parent=1 // pred_check_branch
      %28 = sbr.rel (0) target = $region9
    $region8: #{att_lstm_forward.1} parent=1 // pred_region
      _
    $region9: #{att_lstm_forward.1} parent=1 // pred_fallthru
      _
    // Predicated region
    $region10: #{att_lstm_forward.1} parent=1 // pred_check
      _
    $region11: #{att_lstm_forward.1} parent=1 // pred_check_branch
      %30 = sbr.rel (0) target = $region13
    $region12: #{att_lstm_forward.1} parent=1 // pred_region
      _
    $region13: #{att_lstm_forward.1} parent=1 // pred_fallthru
      _
    // Predicated region
    $region14: #{att_lstm_forward.1} parent=1 // pred_check
      _
    $region15: #{att_lstm_forward.1} parent=1 // pred_check_branch
      %32 = sbr.rel (0) target = $region17
    $region16: #{att_lstm_forward.1} parent=1 // pred_region
      _
    $region17: #{att_lstm_forward.1} parent=1 // pred_fallthru
      _
    // Predicated region
    $region18: #{att_lstm_forward.1} parent=1 // pred_check
      _
    $region19: #{att_lstm_forward.1} parent=1 // pred_check_branch
      %34 = sbr.rel (0) target = $region21
    $region20: #{att_lstm_forward.1} parent=1 // pred_region
      _
    $region21: #{att_lstm_forward.1} parent=1 // pred_fallthru
      _
    // Predicated region
    $region22: #{att_lstm_forward.1} parent=1 // pred_check
      _
    $region23: #{att_lstm_forward.1} parent=1 // pred_check_branch
      %36 = sbr.rel (0) target = $region25
    $region24: #{att_lstm_forward.1} parent=1 // pred_region
      _
    $region25: #{att_lstm_forward.1} parent=1 // pred_fallthru
      _
    // Predicated region
    $region26: #{att_lstm_forward.1} parent=1 // pred_check
      _
    $region27: #{att_lstm_forward.1} parent=1 // pred_check_branch
      %38 = sbr.rel (0) target = $region29
    $region28: #{att_lstm_forward.1} parent=1 // pred_region
      _
    $region29: #{att_lstm_forward.1} parent=1 // pred_fallthru
      _
    // Predicated region
    $region30: #{att_lstm_forward.1} parent=1 // pred_check
      _
    $region31: #{att_lstm_forward.1} parent=1 // pred_check_branch
      %40 = sbr.rel (0) target = $region33
    $region32: #{att_lstm_forward.1} parent=1 // pred_region
      _
    $region33: #{att_lstm_forward.1} parent=1 // pred_fallthru
      _
    // Predicated region
    $region34: #{att_lstm_forward.1} parent=1 // pred_check
      _
    $region35: #{att_lstm_forward.1} parent=1 // pred_check_branch
      %42 = sbr.rel (0) target = $region37
    $region36: #{att_lstm_forward.1} parent=1 // pred_region
      _
    $region37: #{att_lstm_forward.1} parent=1 // pred_fallthru
      _
    // Predicated region
    $region38: #{att_lstm_forward.1} parent=1 // pred_check
      _
    $region39: #{att_lstm_forward.1} parent=1 // pred_check_branch
      %44 = sbr.rel (0) target = $region41
    $region40: #{att_lstm_forward.1} parent=1 // pred_region
      _
    $region41: #{att_lstm_forward.1} parent=1 // pred_fallthru
      _
    // Predicated region
    $region42: #{att_lstm_forward.1} parent=1 // pred_check
      _
    $region43: #{att_lstm_forward.1} parent=1 // pred_check_branch
      %46 = sbr.rel (0) target = $region45
    $region44: #{att_lstm_forward.1} parent=1 // pred_region
      %47 = dma.done [#allocation4], 128
    $region45: #{att_lstm_forward.1} parent=1 // pred_fallthru
      _
    %48 = sfence
    %v49 = vld [vmem:[%s3] sm:$0x1]
    %v51 = vlaneseq
    %v52 = vshrl.u32 %v51, 7
    %v53 = vsub.s32 0, %v52
    %v54 = vrot.slane %v49, %v53
    %v56 = vld [vmem:[%s5] sm:$0x1]
    %v58 = vlaneseq
    %v59 = vshrl.u32 %v58, 7
    %v60 = vsub.s32 0, %v59
    %v61 = vrot.slane %v56, %v60
    %s63 = sld [smem:[#allocation2]]
    %s64 = scalar_lea.vmem %s1, %s63
    %v65 = vld [vmem:[%s64] sm:$0x1]
    %s66 = sld [smem:[#allocation2 + $0x1]]
    %s67 = scalar_lea.vmem %s1, %s66
    %v68 = vld [vmem:[%s67] sm:$0x1]
    %v70 = vlaneseq
    %v71 = vshrl.u32 %v70, 7
    %v72 = vsub.s32 0, %v71
    %v73 = vrot.slane %v68, %v72
    %vm75 = vcmask 1040384
    %v76 = vsel %vm75, %v65, %v73
    %s77 = sld [smem:[#allocation2 + $0x80]]
    %s78 = scalar_lea.vmem %s1, %s77
    %v79 = vld [vmem:[%s78] sm:$0x1]
    %s80 = sld [smem:[#allocation2 + $0x81]]
    %s81 = scalar_lea.vmem %s1, %s80
    %v82 = vld [vmem:[%s81] sm:$0x1]
    %v84 = vlaneseq
    %v85 = vshrl.u32 %v84, 7
    %v86 = vsub.s32 0, %v85
    %v87 = vrot.slane %v82, %v86
    %v89 = vsel %vm75, %v79, %v87
    %s90 = sld [smem:[#allocation2 + $0x100]]
    %s91 = scalar_lea.vmem %s1, %s90
    %v92 = vld [vmem:[%s91] sm:$0x1]
    %s93 = sld [smem:[#allocation2 + $0x101]]
    %s94 = scalar_lea.vmem %s1, %s93
    %v95 = vld [vmem:[%s94] sm:$0x1]
    %v97 = vlaneseq
    %v98 = vshrl.u32 %v97, 7
    %v99 = vsub.s32 0, %v98
    %v100 = vrot.slane %v95, %v99
    %v102 = vsel %vm75, %v92, %v100
    %s103 = sld [smem:[#allocation2 + $0x180]]
    %s104 = scalar_lea.vmem %s1, %s103
    %v105 = vld [vmem:[%s104] sm:$0x1]
    %s106 = sld [smem:[#allocation2 + $0x181]]
    %s107 = scalar_lea.vmem %s1, %s106
    %v108 = vld [vmem:[%s107] sm:$0x1]
    %v110 = vlaneseq
    %v111 = vshrl.u32 %v110, 7
    %v112 = vsub.s32 0, %v111
    %v113 = vrot.slane %v108, %v112
    %v115 = vsel %vm75, %v105, %v113
    %s116 = sld [smem:[#allocation2 + $0x200]]
    %s117 = scalar_lea.vmem %s1, %s116
    %v118 = vld [vmem:[%s117] sm:$0x1]
    %s119 = sld [smem:[#allocation2 + $0x201]]
    %s120 = scalar_lea.vmem %s1, %s119
    %v121 = vld [vmem:[%s120] sm:$0x1]
    %v123 = vlaneseq
    %v124 = vshrl.u32 %v123, 7
    %v125 = vsub.s32 0, %v124
    %v126 = vrot.slane %v121, %v125
    %v128 = vsel %vm75, %v118, %v126
    %s129 = sld [smem:[#allocation2 + $0x280]]
    %s130 = scalar_lea.vmem %s1, %s129
    %v131 = vld [vmem:[%s130] sm:$0x1]
    %s132 = sld [smem:[#allocation2 + $0x281]]
    %s133 = scalar_lea.vmem %s1, %s132
    %v134 = vld [vmem:[%s133] sm:$0x1]
    %v136 = vlaneseq
    %v137 = vshrl.u32 %v136, 7
    %v138 = vsub.s32 0, %v137
    %v139 = vrot.slane %v134, %v138
    %v141 = vsel %vm75, %v131, %v139
    %s142 = sld [smem:[#allocation2 + $0x300]]
    %s143 = scalar_lea.vmem %s1, %s142
    %v144 = vld [vmem:[%s143] sm:$0x1]
    %s145 = sld [smem:[#allocation2 + $0x301]]
    %s146 = scalar_lea.vmem %s1, %s145
    %v147 = vld [vmem:[%s146] sm:$0x1]
    %v149 = vlaneseq
    %v150 = vshrl.u32 %v149, 7
    %v151 = vsub.s32 0, %v150
    %v152 = vrot.slane %v147, %v151
    %v154 = vsel %vm75, %v144, %v152
    %s155 = sld [smem:[#allocation2 + $0x380]]
    %s156 = scalar_lea.vmem %s1, %s155
    %v157 = vld [vmem:[%s156] sm:$0x1]
    %s158 = sld [smem:[#allocation2 + $0x381]]
    %s159 = scalar_lea.vmem %s1, %s158
    %v160 = vld [vmem:[%s159] sm:$0x1]
    %v162 = vlaneseq
    %v163 = vshrl.u32 %v162, 7
    %v164 = vsub.s32 0, %v163
    %v165 = vrot.slane %v160, %v164
    %v167 = vsel %vm75, %v157, %v165
    %vm168 = vcmask 261120
    %v169 = vsel %vm168, %v76, 0.0
    %v170 = vld [vmem:[%s2] sm:$0xff]
    %v171 = vld [vmem:[%s2 + $0x8] sm:$0xff]
    %v172 = vld [vmem:[%s2 + $0x10] sm:$0xff]
    %v173 = vld [vmem:[%s2 + $0x18] sm:$0xff]
    %v174 = vld [vmem:[%s2 + $0x20] sm:$0xff]
    %v175 = vld [vmem:[%s2 + $0x28] sm:$0xff]
    %v176 = vld [vmem:[%s2 + $0x30] sm:$0xff]
    %v177 = vld [vmem:[%s2 + $0x38] sm:$0xff]
    %vm178 = vcmask 523264
    %v180 = vsel %vm178, %v169, 0
    %182 = vmatprep.subr.mxu0 0.0
    %183 = vmatpush1.msra.mxu0 %v170
    %184 = vmatprep.subr.mxu0 0.0
    %185 = vmatpush1.msra.mxu0 %v171
    %186 = vmatprep.subr.mxu0 0.0
    %187 = vmatpush1.msra.mxu0 %v172
    %188 = vmatprep.subr.mxu0 0.0
    %189 = vmatpush1.msra.mxu0 %v173
    %190 = vmatprep.subr.mxu0 0.0
    %191 = vmatpush1.msra.mxu0 %v174
    %192 = vmatprep.subr.mxu0 0.0
    %193 = vmatpush1.msra.mxu0 %v175
    %194 = vmatprep.subr.mxu0 0.0
    %195 = vmatpush1.msra.mxu0 %v176
    %196 = vmatprep.subr.mxu0 0.0
    %197 = vmatpush1.msra.mxu0 %v177
    %198 = vmatprep.subr.mxu0 0.0
    %199 = vmatpush1.msra.mxu0 0.0
    %200 = vmatprep.subr.mxu0 0.0
    %201 = vmatpush1.msra.mxu0 0.0
    %202 = vmatprep.subr.mxu0 0.0
    %203 = vmatpush1.msra.mxu0 0.0
    %204 = vmatprep.subr.mxu0 0.0
    %205 = vmatpush1.msra.mxu0 0.0
    %206 = vmatprep.subr.mxu0 0.0
    %207 = vmatpush1.msra.mxu0 0.0
    %208 = vmatprep.subr.mxu0 0.0
    %209 = vmatpush1.msra.mxu0 0.0
    %210 = vmatprep.subr.mxu0 0.0
    %211 = vmatpush1.msra.mxu0 0.0
    %212 = vmatprep.subr.mxu0 0.0
    %213 = vmatpush1.msra.mxu0 0.0
    %214 = vmatprep.subr.mxu0 0.0
    %215 = vmatpush1.msra.mxu0 0.0
    %216 = vmatprep.subr.mxu0 0.0
    %217 = vmatpush1.msra.mxu0 0.0
    %218 = vmatprep.subr.mxu0 0.0
    %219 = vmatpush1.msra.mxu0 0.0
    %220 = vmatprep.subr.mxu0 0.0
    %221 = vmatpush1.msra.mxu0 0.0
    %222 = vmatprep.subr.mxu0 0.0
    %223 = vmatpush1.msra.mxu0 0.0
    %224 = vmatprep.subr.mxu0 0.0
    %225 = vmatpush1.msra.mxu0 0.0
    %226 = vmatprep.subr.mxu0 0.0
    %227 = vmatpush1.msra.mxu0 0.0
    %228 = vmatprep.subr.mxu0 0.0
    %229 = vmatpush1.msra.mxu0 0.0
    %230 = vmatprep.subr.mxu0 0.0
    %231 = vmatpush1.msra.mxu0 0.0
    %232 = vmatprep.subr.mxu0 0.0
    %233 = vmatpush1.msra.mxu0 0.0
    %234 = vmatprep.subr.mxu0 0.0
    %235 = vmatpush1.msra.mxu0 0.0
    %236 = vmatprep.subr.mxu0 0.0
    %237 = vmatpush1.msra.mxu0 0.0
    %238 = vmatprep.subr.mxu0 0.0
    %239 = vmatpush1.msra.mxu0 0.0
    %240 = vmatprep.subr.mxu0 0.0
    %241 = vmatpush1.msra.mxu0 0.0
    %242 = vmatprep.subr.mxu0 0.0
    %243 = vmatpush1.msra.mxu0 0.0
    %244 = vmatprep.subr.mxu0 0.0
    %245 = vmatpush1.msra.mxu0 0.0
    %246 = vmatprep.mubr.f32.mxu0 0.0
    %247 = vmatmul.mubr.f32.gmra.mrb[0].mxu0 %v180
    %v248 = vpop.f32.mrb[0].mxu0
    %v249 = vadd.f32 %v54, %v248
    %v250 = vpop.f32.mrb[0].mxu0
    %251 = vdwg.mxu0
    %v252 = vxor.u32 %v249, 2147483648
    %v253 = vmul.f32 %v252, 1.442695
    %v254 = vpow.pop %v253
    %v255 = vadd.f32 %v254, 1.0
    %v256 = vrcp.pop %v255
    %v257 = vmul.f32 1.0, %v256
    %v258 = vtanh.pop %v249
    %v259 = vmul.f32 %v257, 0.0
    %261 = vrot.lane.b32.xlu0 %v258, 64
    %v262 = vpop.permute.xlu0 %261
    %v264 = vmul.f32 %v257, %v262
    %266 = vrot.lane.b32.xlu0 %v264, 32
    %v267 = vpop.permute.xlu0 %266
    %v269 = vadd.f32 %v259, %v267
    %v270 = vtanh.pop %v269
    %272 = vrot.lane.b32.xlu0 %v270, 64
    %v273 = vpop.permute.xlu0 %272
    %v275 = vmul.f32 %v257, %v273
    %v276 = vsel %vm168, %v167, 0.0
    %v277 = vld [vmem:[%s4] sm:$0xff]
    %v278 = vld [vmem:[%s4 + $0x8] sm:$0xff]
    %v279 = vld [vmem:[%s4 + $0x10] sm:$0xff]
    %v280 = vld [vmem:[%s4 + $0x18] sm:$0xff]
    %v281 = vld [vmem:[%s4 + $0x20] sm:$0xff]
    %v282 = vld [vmem:[%s4 + $0x28] sm:$0xff]
    %v283 = vld [vmem:[%s4 + $0x30] sm:$0xff]
    %v284 = vld [vmem:[%s4 + $0x38] sm:$0xff]
    %v286 = vsel %vm178, %v276, 0
    %288 = vmatprep.subr.mxu0 0.0
    %289 = vmatpush1.msra.mxu0 %v277
    %290 = vmatprep.subr.mxu0 0.0
    %291 = vmatpush1.msra.mxu0 %v278
    %292 = vmatprep.subr.mxu0 0.0
    %293 = vmatpush1.msra.mxu0 %v279
    %294 = vmatprep.subr.mxu0 0.0
    %295 = vmatpush1.msra.mxu0 %v280
    %296 = vmatprep.subr.mxu0 0.0
    %297 = vmatpush1.msra.mxu0 %v281
    %298 = vmatprep.subr.mxu0 0.0
    %299 = vmatpush1.msra.mxu0 %v282
    %300 = vmatprep.subr.mxu0 0.0
    %301 = vmatpush1.msra.mxu0 %v283
    %302 = vmatprep.subr.mxu0 0.0
    %303 = vmatpush1.msra.mxu0 %v284
    %304 = vmatprep.subr.mxu0 0.0
    %305 = vmatpush1.msra.mxu0 0.0
    %306 = vmatprep.subr.mxu0 0.0
    %307 = vmatpush1.msra.mxu0 0.0
    %308 = vmatprep.subr.mxu0 0.0
    %309 = vmatpush1.msra.mxu0 0.0
    %310 = vmatprep.subr.mxu0 0.0
    %311 = vmatpush1.msra.mxu0 0.0
    %312 = vmatprep.subr.mxu0 0.0
    %313 = vmatpush1.msra.mxu0 0.0
    %314 = vmatprep.subr.mxu0 0.0
    %315 = vmatpush1.msra.mxu0 0.0
    %316 = vmatprep.subr.mxu0 0.0
    %317 = vmatpush1.msra.mxu0 0.0
    %318 = vmatprep.subr.mxu0 0.0
    %319 = vmatpush1.msra.mxu0 0.0
    %320 = vmatprep.subr.mxu0 0.0
    %321 = vmatpush1.msra.mxu0 0.0
    %322 = vmatprep.subr.mxu0 0.0
    %323 = vmatpush1.msra.mxu0 0.0
    %324 = vmatprep.subr.mxu0 0.0
    %325 = vmatpush1.msra.mxu0 0.0
    %326 = vmatprep.subr.mxu0 0.0
    %327 = vmatpush1.msra.mxu0 0.0
    %328 = vmatprep.subr.mxu0 0.0
    %329 = vmatpush1.msra.mxu0 0.0
    %330 = vmatprep.subr.mxu0 0.0
    %331 = vmatpush1.msra.mxu0 0.0
    %332 = vmatprep.subr.mxu0 0.0
    %333 = vmatpush1.msra.mxu0 0.0
    %334 = vmatprep.subr.mxu0 0.0
    %335 = vmatpush1.msra.mxu0 0.0
    %336 = vmatprep.subr.mxu0 0.0
    %337 = vmatpush1.msra.mxu0 0.0
    %338 = vmatprep.subr.mxu0 0.0
    %339 = vmatpush1.msra.mxu0 0.0
    %340 = vmatprep.subr.mxu0 0.0
    %341 = vmatpush1.msra.mxu0 0.0
    %342 = vmatprep.subr.mxu0 0.0
    %343 = vmatpush1.msra.mxu0 0.0
    %344 = vmatprep.subr.mxu0 0.0
    %345 = vmatpush1.msra.mxu0 0.0
    %346 = vmatprep.subr.mxu0 0.0
    %347 = vmatpush1.msra.mxu0 0.0
    %348 = vmatprep.subr.mxu0 0.0
    %349 = vmatpush1.msra.mxu0 0.0
    %350 = vmatprep.subr.mxu0 0.0
    %351 = vmatpush1.msra.mxu0 0.0
    %352 = vmatprep.mubr.f32.mxu0 0.0
    %353 = vmatmul.mubr.f32.gmra.mrb[0].mxu0 %v286
    %v354 = vpop.f32.mrb[0].mxu0
    %v355 = vadd.f32 %v61, %v354
    %v356 = vpop.f32.mrb[0].mxu0
    %357 = vdwg.mxu0
    %v358 = vxor.u32 %v355, 2147483648
    %v359 = vmul.f32 %v358, 1.442695
    %v360 = vpow.pop %v359
    %v361 = vadd.f32 %v360, 1.0
    %v362 = vrcp.pop %v361
    %v363 = vmul.f32 1.0, %v362
    %v364 = vtanh.pop %v355
    %v365 = vmul.f32 %v363, 0.0
    %367 = vrot.lane.b32.xlu0 %v364, 64
    %v368 = vpop.permute.xlu0 %367
    %v370 = vmul.f32 %v363, %v368
    %372 = vrot.lane.b32.xlu0 %v370, 32
    %v373 = vpop.permute.xlu0 %372
    %v375 = vadd.f32 %v365, %v373
    %v376 = vtanh.pop %v375
    %378 = vrot.lane.b32.xlu0 %v376, 64
    %v379 = vpop.permute.xlu0 %378
    %v381 = vmul.f32 %v363, %v379
    %383 = vrot.lane.b32.xlu0 %v275, 64
    %v384 = vpop.permute.xlu0 %383
    %v386 = vsel %vm168, %v89, %v384
    %v388 = vsel %vm178, %v386, 0
    %390 = vmatprep.subr.mxu0 0.0
    %391 = vmatpush1.msra.mxu0 %v170
    %392 = vmatprep.subr.mxu0 0.0
    %393 = vmatpush1.msra.mxu0 %v171
    %394 = vmatprep.subr.mxu0 0.0
    %395 = vmatpush1.msra.mxu0 %v172
    %396 = vmatprep.subr.mxu0 0.0
    %397 = vmatpush1.msra.mxu0 %v173
    %398 = vmatprep.subr.mxu0 0.0
    %399 = vmatpush1.msra.mxu0 %v174
    %400 = vmatprep.subr.mxu0 0.0
    %401 = vmatpush1.msra.mxu0 %v175
    %402 = vmatprep.subr.mxu0 0.0
    %403 = vmatpush1.msra.mxu0 %v176
    %404 = vmatprep.subr.mxu0 0.0
    %405 = vmatpush1.msra.mxu0 %v177
    %406 = vmatprep.subr.mxu0 0.0
    %407 = vmatpush1.msra.mxu0 0.0
    %408 = vmatprep.subr.mxu0 0.0
    %409 = vmatpush1.msra.mxu0 0.0
    %410 = vmatprep.subr.mxu0 0.0
    %411 = vmatpush1.msra.mxu0 0.0
    %412 = vmatprep.subr.mxu0 0.0
    %413 = vmatpush1.msra.mxu0 0.0
    %414 = vmatprep.subr.mxu0 0.0
    %415 = vmatpush1.msra.mxu0 0.0
    %416 = vmatprep.subr.mxu0 0.0
    %417 = vmatpush1.msra.mxu0 0.0
    %418 = vmatprep.subr.mxu0 0.0
    %419 = vmatpush1.msra.mxu0 0.0
    %420 = vmatprep.subr.mxu0 0.0
    %421 = vmatpush1.msra.mxu0 0.0
    %422 = vmatprep.subr.mxu0 0.0
    %423 = vmatpush1.msra.mxu0 0.0
    %424 = vmatprep.subr.mxu0 0.0
    %425 = vmatpush1.msra.mxu0 0.0
    %426 = vmatprep.subr.mxu0 0.0
    %427 = vmatpush1.msra.mxu0 0.0
    %428 = vmatprep.subr.mxu0 0.0
    %429 = vmatpush1.msra.mxu0 0.0
    %430 = vmatprep.subr.mxu0 0.0
    %431 = vmatpush1.msra.mxu0 0.0
    %432 = vmatprep.subr.mxu0 0.0
    %433 = vmatpush1.msra.mxu0 0.0
    %434 = vmatprep.subr.mxu0 0.0
    %435 = vmatpush1.msra.mxu0 0.0
    %436 = vmatprep.subr.mxu0 0.0
    %437 = vmatpush1.msra.mxu0 0.0
    %438 = vmatprep.subr.mxu0 0.0
    %439 = vmatpush1.msra.mxu0 0.0
    %440 = vmatprep.subr.mxu0 0.0
    %441 = vmatpush1.msra.mxu0 0.0
    %442 = vmatprep.subr.mxu0 0.0
    %443 = vmatpush1.msra.mxu0 0.0
    %444 = vmatprep.subr.mxu0 0.0
    %445 = vmatpush1.msra.mxu0 0.0
    %446 = vmatprep.subr.mxu0 0.0
    %447 = vmatpush1.msra.mxu0 0.0
    %448 = vmatprep.subr.mxu0 0.0
    %449 = vmatpush1.msra.mxu0 0.0
    %450 = vmatprep.subr.mxu0 0.0
    %451 = vmatpush1.msra.mxu0 0.0
    %452 = vmatprep.subr.mxu0 0.0
    %453 = vmatpush1.msra.mxu0 0.0
    %454 = vmatprep.mubr.f32.mxu0 0.0
    %455 = vmatmul.mubr.f32.gmra.mrb[0].mxu0 %v388
    %v456 = vpop.f32.mrb[0].mxu0
    %v457 = vadd.f32 %v54, %v456
    %v458 = vpop.f32.mrb[0].mxu0
    %459 = vdwg.mxu0
    %v460 = vxor.u32 %v457, 2147483648
    %v461 = vmul.f32 %v460, 1.442695
    %v462 = vpow.pop %v461
    %v463 = vadd.f32 %v462, 1.0
    %v464 = vrcp.pop %v463
    %v465 = vmul.f32 1.0, %v464
    %v466 = vtanh.pop %v457
    %v467 = vmul.f32 %v465, %v269
    %469 = vrot.lane.b32.xlu0 %v466, 64
    %v470 = vpop.permute.xlu0 %469
    %v472 = vmul.f32 %v465, %v470
    %474 = vrot.lane.b32.xlu0 %v472, 32
    %v475 = vpop.permute.xlu0 %474
    %v477 = vadd.f32 %v467, %v475
    %v478 = vtanh.pop %v477
    %480 = vrot.lane.b32.xlu0 %v478, 64
    %v481 = vpop.permute.xlu0 %480
    %v483 = vmul.f32 %v465, %v481
    %485 = vrot.lane.b32.xlu0 %v381, 64
    %v486 = vpop.permute.xlu0 %485
    %v488 = vsel %vm168, %v154, %v486
    %v490 = vsel %vm178, %v488, 0
    %492 = vmatprep.subr.mxu0 0.0
    %493 = vmatpush1.msra.mxu0 %v277
    %494 = vmatprep.subr.mxu0 0.0
    %495 = vmatpush1.msra.mxu0 %v278
    %496 = vmatprep.subr.mxu0 0.0
    %497 = vmatpush1.msra.mxu0 %v279
    %498 = vmatprep.subr.mxu0 0.0
    %499 = vmatpush1.msra.mxu0 %v280
    %500 = vmatprep.subr.mxu0 0.0
    %501 = vmatpush1.msra.mxu0 %v281
    %502 = vmatprep.subr.mxu0 0.0
    %503 = vmatpush1.msra.mxu0 %v282
    %504 = vmatprep.subr.mxu0 0.0
    %505 = vmatpush1.msra.mxu0 %v283
    %506 = vmatprep.subr.mxu0 0.0
    %507 = vmatpush1.msra.mxu0 %v284
    %508 = vmatprep.subr.mxu0 0.0
    %509 = vmatpush1.msra.mxu0 0.0
    %510 = vmatprep.subr.mxu0 0.0
    %511 = vmatpush1.msra.mxu0 0.0
    %512 = vmatprep.subr.mxu0 0.0
    %513 = vmatpush1.msra.mxu0 0.0
    %514 = vmatprep.subr.mxu0 0.0
    %515 = vmatpush1.msra.mxu0 0.0
    %516 = vmatprep.subr.mxu0 0.0
    %517 = vmatpush1.msra.mxu0 0.0
    %518 = vmatprep.subr.mxu0 0.0
    %519 = vmatpush1.msra.mxu0 0.0
    %520 = vmatprep.subr.mxu0 0.0
    %521 = vmatpush1.msra.mxu0 0.0
    %522 = vmatprep.subr.mxu0 0.0
    %523 = vmatpush1.msra.mxu0 0.0
    %524 = vmatprep.subr.mxu0 0.0
    %525 = vmatpush1.msra.mxu0 0.0
    %526 = vmatprep.subr.mxu0 0.0
    %527 = vmatpush1.msra.mxu0 0.0
    %528 = vmatprep.subr.mxu0 0.0
    %529 = vmatpush1.msra.mxu0 0.0
    %530 = vmatprep.subr.mxu0 0.0
    %531 = vmatpush1.msra.mxu0 0.0
    %532 = vmatprep.subr.mxu0 0.0
    %533 = vmatpush1.msra.mxu0 0.0
    %534 = vmatprep.subr.mxu0 0.0
    %535 = vmatpush1.msra.mxu0 0.0
    %536 = vmatprep.subr.mxu0 0.0
    %537 = vmatpush1.msra.mxu0 0.0
    %538 = vmatprep.subr.mxu0 0.0
    %539 = vmatpush1.msra.mxu0 0.0
    %540 = vmatprep.subr.mxu0 0.0
    %541 = vmatpush1.msra.mxu0 0.0
    %542 = vmatprep.subr.mxu0 0.0
    %543 = vmatpush1.msra.mxu0 0.0
    %544 = vmatprep.subr.mxu0 0.0
    %545 = vmatpush1.msra.mxu0 0.0
    %546 = vmatprep.subr.mxu0 0.0
    %547 = vmatpush1.msra.mxu0 0.0
    %548 = vmatprep.subr.mxu0 0.0
    %549 = vmatpush1.msra.mxu0 0.0
    %550 = vmatprep.subr.mxu0 0.0
    %551 = vmatpush1.msra.mxu0 0.0
    %552 = vmatprep.subr.mxu0 0.0
    %553 = vmatpush1.msra.mxu0 0.0
    %554 = vmatprep.subr.mxu0 0.0
    %555 = vmatpush1.msra.mxu0 0.0
    %556 = vmatprep.mubr.f32.mxu0 0.0
    %557 = vmatmul.mubr.f32.gmra.mrb[0].mxu0 %v490
    %v558 = vpop.f32.mrb[0].mxu0
    %v559 = vadd.f32 %v61, %v558
    %v560 = vpop.f32.mrb[0].mxu0
    %561 = vdwg.mxu0
    %v562 = vxor.u32 %v559, 2147483648
    %v563 = vmul.f32 %v562, 1.442695
    %v564 = vpow.pop %v563
    %v565 = vadd.f32 %v564, 1.0
    %v566 = vrcp.pop %v565
    %v567 = vmul.f32 1.0, %v566
    %v568 = vtanh.pop %v559
    %v569 = vmul.f32 %v567, %v375
    %571 = vrot.lane.b32.xlu0 %v568, 64
    %v572 = vpop.permute.xlu0 %571
    %v574 = vmul.f32 %v567, %v572
    %576 = vrot.lane.b32.xlu0 %v574, 32
    %v577 = vpop.permute.xlu0 %576
    %v579 = vadd.f32 %v569, %v577
    %v580 = vtanh.pop %v579
    %582 = vrot.lane.b32.xlu0 %v580, 64
    %v583 = vpop.permute.xlu0 %582
    %v585 = vmul.f32 %v567, %v583
    %587 = vrot.lane.b32.xlu0 %v483, 64
    %v588 = vpop.permute.xlu0 %587
    %v590 = vsel %vm168, %v102, %v588
    %v592 = vsel %vm178, %v590, 0
    %594 = vmatprep.subr.mxu0 0.0
    %595 = vmatpush1.msra.mxu0 %v170
    %596 = vmatprep.subr.mxu0 0.0
    %597 = vmatpush1.msra.mxu0 %v171
    %598 = vmatprep.subr.mxu0 0.0
    %599 = vmatpush1.msra.mxu0 %v172
    %600 = vmatprep.subr.mxu0 0.0
    %601 = vmatpush1.msra.mxu0 %v173
    %602 = vmatprep.subr.mxu0 0.0
    %603 = vmatpush1.msra.mxu0 %v174
    %604 = vmatprep.subr.mxu0 0.0
    %605 = vmatpush1.msra.mxu0 %v175
    %606 = vmatprep.subr.mxu0 0.0
    %607 = vmatpush1.msra.mxu0 %v176
    %608 = vmatprep.subr.mxu0 0.0
    %609 = vmatpush1.msra.mxu0 %v177
    %610 = vmatprep.subr.mxu0 0.0
    %611 = vmatpush1.msra.mxu0 0.0
    %612 = vmatprep.subr.mxu0 0.0
    %613 = vmatpush1.msra.mxu0 0.0
    %614 = vmatprep.subr.mxu0 0.0
    %615 = vmatpush1.msra.mxu0 0.0
    %616 = vmatprep.subr.mxu0 0.0
    %617 = vmatpush1.msra.mxu0 0.0
    %618 = vmatprep.subr.mxu0 0.0
    %619 = vmatpush1.msra.mxu0 0.0
    %620 = vmatprep.subr.mxu0 0.0
    %621 = vmatpush1.msra.mxu0 0.0
    %622 = vmatprep.subr.mxu0 0.0
    %623 = vmatpush1.msra.mxu0 0.0
    %624 = vmatprep.subr.mxu0 0.0
    %625 = vmatpush1.msra.mxu0 0.0
    %626 = vmatprep.subr.mxu0 0.0
    %627 = vmatpush1.msra.mxu0 0.0
    %628 = vmatprep.subr.mxu0 0.0
    %629 = vmatpush1.msra.mxu0 0.0
    %630 = vmatprep.subr.mxu0 0.0
    %631 = vmatpush1.msra.mxu0 0.0
    %632 = vmatprep.subr.mxu0 0.0
    %633 = vmatpush1.msra.mxu0 0.0
    %634 = vmatprep.subr.mxu0 0.0
    %635 = vmatpush1.msra.mxu0 0.0
    %636 = vmatprep.subr.mxu0 0.0
    %637 = vmatpush1.msra.mxu0 0.0
    %638 = vmatprep.subr.mxu0 0.0
    %639 = vmatpush1.msra.mxu0 0.0
    %640 = vmatprep.subr.mxu0 0.0
    %641 = vmatpush1.msra.mxu0 0.0
    %642 = vmatprep.subr.mxu0 0.0
    %643 = vmatpush1.msra.mxu0 0.0
    %644 = vmatprep.subr.mxu0 0.0
    %645 = vmatpush1.msra.mxu0 0.0
    %646 = vmatprep.subr.mxu0 0.0
    %647 = vmatpush1.msra.mxu0 0.0
    %648 = vmatprep.subr.mxu0 0.0
    %649 = vmatpush1.msra.mxu0 0.0
    %650 = vmatprep.subr.mxu0 0.0
    %651 = vmatpush1.msra.mxu0 0.0
    %652 = vmatprep.subr.mxu0 0.0
    %653 = vmatpush1.msra.mxu0 0.0
    %654 = vmatprep.subr.mxu0 0.0
    %655 = vmatpush1.msra.mxu0 0.0
    %656 = vmatprep.subr.mxu0 0.0
    %657 = vmatpush1.msra.mxu0 0.0
    %658 = vmatprep.mubr.f32.mxu0 0.0
    %659 = vmatmul.mubr.f32.gmra.mrb[0].mxu0 %v592
    %v660 = vpop.f32.mrb[0].mxu0
    %v661 = vadd.f32 %v54, %v660
    %v662 = vpop.f32.mrb[0].mxu0
    %663 = vdwg.mxu0
    %v664 = vxor.u32 %v661, 2147483648
    %v665 = vmul.f32 %v664, 1.442695
    %v666 = vpow.pop %v665
    %v667 = vadd.f32 %v666, 1.0
    %v668 = vrcp.pop %v667
    %v669 = vmul.f32 1.0, %v668
    %v670 = vtanh.pop %v661
    %v671 = vmul.f32 %v669, %v477
    %673 = vrot.lane.b32.xlu0 %v670, 64
    %v674 = vpop.permute.xlu0 %673
    %v676 = vmul.f32 %v669, %v674
    %678 = vrot.lane.b32.xlu0 %v676, 32
    %v679 = vpop.permute.xlu0 %678
    %v681 = vadd.f32 %v671, %v679
    %v682 = vtanh.pop %v681
    %684 = vrot.lane.b32.xlu0 %v682, 64
    %v685 = vpop.permute.xlu0 %684
    %v687 = vmul.f32 %v669, %v685
    %689 = vrot.lane.b32.xlu0 %v585, 64
    %v690 = vpop.permute.xlu0 %689
    %v692 = vsel %vm168, %v141, %v690
    %v694 = vsel %vm178, %v692, 0
    %696 = vmatprep.subr.mxu0 0.0
    %697 = vmatpush1.msra.mxu0 %v277
    %698 = vmatprep.subr.mxu0 0.0
    %699 = vmatpush1.msra.mxu0 %v278
    %700 = vmatprep.subr.mxu0 0.0
    %701 = vmatpush1.msra.mxu0 %v279
    %702 = vmatprep.subr.mxu0 0.0
    %703 = vmatpush1.msra.mxu0 %v280
    %704 = vmatprep.subr.mxu0 0.0
    %705 = vmatpush1.msra.mxu0 %v281
    %706 = vmatprep.subr.mxu0 0.0
    %707 = vmatpush1.msra.mxu0 %v282
    %708 = vmatprep.subr.mxu0 0.0
    %709 = vmatpush1.msra.mxu0 %v283
    %710 = vmatprep.subr.mxu0 0.0
    %711 = vmatpush1.msra.mxu0 %v284
    %712 = vmatprep.subr.mxu0 0.0
    %713 = vmatpush1.msra.mxu0 0.0
    %714 = vmatprep.subr.mxu0 0.0
    %715 = vmatpush1.msra.mxu0 0.0
    %716 = vmatprep.subr.mxu0 0.0
    %717 = vmatpush1.msra.mxu0 0.0
    %718 = vmatprep.subr.mxu0 0.0
    %719 = vmatpush1.msra.mxu0 0.0
    %720 = vmatprep.subr.mxu0 0.0
    %721 = vmatpush1.msra.mxu0 0.0
    %722 = vmatprep.subr.mxu0 0.0
    %723 = vmatpush1.msra.mxu0 0.0
    %724 = vmatprep.subr.mxu0 0.0
    %725 = vmatpush1.msra.mxu0 0.0
    %726 = vmatprep.subr.mxu0 0.0
    %727 = vmatpush1.msra.mxu0 0.0
    %728 = vmatprep.subr.mxu0 0.0
    %729 = vmatpush1.msra.mxu0 0.0
    %730 = vmatprep.subr.mxu0 0.0
    %731 = vmatpush1.msra.mxu0 0.0
    %732 = vmatprep.subr.mxu0 0.0
    %733 = vmatpush1.msra.mxu0 0.0
    %734 = vmatprep.subr.mxu0 0.0
    %735 = vmatpush1.msra.mxu0 0.0
    %736 = vmatprep.subr.mxu0 0.0
    %737 = vmatpush1.msra.mxu0 0.0
    %738 = vmatprep.subr.mxu0 0.0
    %739 = vmatpush1.msra.mxu0 0.0
    %740 = vmatprep.subr.mxu0 0.0
    %741 = vmatpush1.msra.mxu0 0.0
    %742 = vmatprep.subr.mxu0 0.0
    %743 = vmatpush1.msra.mxu0 0.0
    %744 = vmatprep.subr.mxu0 0.0
    %745 = vmatpush1.msra.mxu0 0.0
    %746 = vmatprep.subr.mxu0 0.0
    %747 = vmatpush1.msra.mxu0 0.0
    %748 = vmatprep.subr.mxu0 0.0
    %749 = vmatpush1.msra.mxu0 0.0
    %750 = vmatprep.subr.mxu0 0.0
    %751 = vmatpush1.msra.mxu0 0.0
    %752 = vmatprep.subr.mxu0 0.0
    %753 = vmatpush1.msra.mxu0 0.0
    %754 = vmatprep.subr.mxu0 0.0
    %755 = vmatpush1.msra.mxu0 0.0
    %756 = vmatprep.subr.mxu0 0.0
    %757 = vmatpush1.msra.mxu0 0.0
    %758 = vmatprep.subr.mxu0 0.0
    %759 = vmatpush1.msra.mxu0 0.0
    %760 = vmatprep.mubr.f32.mxu0 0.0
    %761 = vmatmul.mubr.f32.gmra.mrb[0].mxu0 %v694
    %v762 = vpop.f32.mrb[0].mxu0
    %v763 = vadd.f32 %v61, %v762
    %v764 = vpop.f32.mrb[0].mxu0
    %765 = vdwg.mxu0
    %v766 = vxor.u32 %v763, 2147483648
    %v767 = vmul.f32 %v766, 1.442695
    %v768 = vpow.pop %v767
    %v769 = vadd.f32 %v768, 1.0
    %v770 = vrcp.pop %v769
    %v771 = vmul.f32 1.0, %v770
    %v772 = vtanh.pop %v763
    %v773 = vmul.f32 %v771, %v579
    %775 = vrot.lane.b32.xlu0 %v772, 64
    %v776 = vpop.permute.xlu0 %775
    %v778 = vmul.f32 %v771, %v776
    %780 = vrot.lane.b32.xlu0 %v778, 32
    %v781 = vpop.permute.xlu0 %780
    %v783 = vadd.f32 %v773, %v781
    %v784 = vtanh.pop %v783
    %786 = vrot.lane.b32.xlu0 %v784, 64
    %v787 = vpop.permute.xlu0 %786
    %v789 = vmul.f32 %v771, %v787
    %791 = vrot.lane.b32.xlu0 %v687, 64
    %v792 = vpop.permute.xlu0 %791
    %v794 = vsel %vm168, %v115, %v792
    %v796 = vsel %vm178, %v794, 0
    %798 = vmatprep.subr.mxu0 0.0
    %799 = vmatpush1.msra.mxu0 %v170
    %800 = vmatprep.subr.mxu0 0.0
    %801 = vmatpush1.msra.mxu0 %v171
    %802 = vmatprep.subr.mxu0 0.0
    %803 = vmatpush1.msra.mxu0 %v172
    %804 = vmatprep.subr.mxu0 0.0
    %805 = vmatpush1.msra.mxu0 %v173
    %806 = vmatprep.subr.mxu0 0.0
    %807 = vmatpush1.msra.mxu0 %v174
    %808 = vmatprep.subr.mxu0 0.0
    %809 = vmatpush1.msra.mxu0 %v175
    %810 = vmatprep.subr.mxu0 0.0
    %811 = vmatpush1.msra.mxu0 %v176
    %812 = vmatprep.subr.mxu0 0.0
    %813 = vmatpush1.msra.mxu0 %v177
    %814 = vmatprep.subr.mxu0 0.0
    %815 = vmatpush1.msra.mxu0 0.0
    %816 = vmatprep.subr.mxu0 0.0
    %817 = vmatpush1.msra.mxu0 0.0
    %818 = vmatprep.subr.mxu0 0.0
    %819 = vmatpush1.msra.mxu0 0.0
    %820 = vmatprep.subr.mxu0 0.0
    %821 = vmatpush1.msra.mxu0 0.0
    %822 = vmatprep.subr.mxu0 0.0
    %823 = vmatpush1.msra.mxu0 0.0
    %824 = vmatprep.subr.mxu0 0.0
    %825 = vmatpush1.msra.mxu0 0.0
    %826 = vmatprep.subr.mxu0 0.0
    %827 = vmatpush1.msra.mxu0 0.0
    %828 = vmatprep.subr.mxu0 0.0
    %829 = vmatpush1.msra.mxu0 0.0
    %830 = vmatprep.subr.mxu0 0.0
    %831 = vmatpush1.msra.mxu0 0.0
    %832 = vmatprep.subr.mxu0 0.0
    %833 = vmatpush1.msra.mxu0 0.0
    %834 = vmatprep.subr.mxu0 0.0
    %835 = vmatpush1.msra.mxu0 0.0
    %836 = vmatprep.subr.mxu0 0.0
    %837 = vmatpush1.msra.mxu0 0.0
    %838 = vmatprep.subr.mxu0 0.0
    %839 = vmatpush1.msra.mxu0 0.0
    %840 = vmatprep.subr.mxu0 0.0
    %841 = vmatpush1.msra.mxu0 0.0
    %842 = vmatprep.subr.mxu0 0.0
    %843 = vmatpush1.msra.mxu0 0.0
    %844 = vmatprep.subr.mxu0 0.0
    %845 = vmatpush1.msra.mxu0 0.0
    %846 = vmatprep.subr.mxu0 0.0
    %847 = vmatpush1.msra.mxu0 0.0
    %848 = vmatprep.subr.mxu0 0.0
    %849 = vmatpush1.msra.mxu0 0.0
    %850 = vmatprep.subr.mxu0 0.0
    %851 = vmatpush1.msra.mxu0 0.0
    %852 = vmatprep.subr.mxu0 0.0
    %853 = vmatpush1.msra.mxu0 0.0
    %854 = vmatprep.subr.mxu0 0.0
    %855 = vmatpush1.msra.mxu0 0.0
    %856 = vmatprep.subr.mxu0 0.0
    %857 = vmatpush1.msra.mxu0 0.0
    %858 = vmatprep.subr.mxu0 0.0
    %859 = vmatpush1.msra.mxu0 0.0
    %860 = vmatprep.subr.mxu0 0.0
    %861 = vmatpush1.msra.mxu0 0.0
    %862 = vmatprep.mubr.f32.mxu0 0.0
    %863 = vmatmul.mubr.f32.gmra.mrb[0].mxu0 %v796
    %v864 = vpop.f32.mrb[0].mxu0
    %v865 = vadd.f32 %v54, %v864
    %v866 = vpop.f32.mrb[0].mxu0
    %867 = vdwg.mxu0
    %v868 = vxor.u32 %v865, 2147483648
    %v869 = vmul.f32 %v868, 1.442695
    %v870 = vpow.pop %v869
    %v871 = vadd.f32 %v870, 1.0
    %v872 = vrcp.pop %v871
    %v873 = vmul.f32 1.0, %v872
    %v874 = vtanh.pop %v865
    %v875 = vmul.f32 %v873, %v681
    %877 = vrot.lane.b32.xlu0 %v874, 64
    %v878 = vpop.permute.xlu0 %877
    %v880 = vmul.f32 %v873, %v878
    %882 = vrot.lane.b32.xlu0 %v880, 32
    %v883 = vpop.permute.xlu0 %882
    %v885 = vadd.f32 %v875, %v883
    %v886 = vtanh.pop %v885
    %888 = vrot.lane.b32.xlu0 %v886, 64
    %v889 = vpop.permute.xlu0 %888
    %v891 = vmul.f32 %v873, %v889
    %893 = vrot.lane.b32.xlu0 %v789, 64
    %v894 = vpop.permute.xlu0 %893
    %v896 = vsel %vm168, %v128, %v894
    %v898 = vsel %vm178, %v896, 0
    %900 = vmatprep.subr.mxu0 0.0
    %901 = vmatpush1.msra.mxu0 %v277
    %902 = vmatprep.subr.mxu0 0.0
    %903 = vmatpush1.msra.mxu0 %v278
    %904 = vmatprep.subr.mxu0 0.0
    %905 = vmatpush1.msra.mxu0 %v279
    %906 = vmatprep.subr.mxu0 0.0
    %907 = vmatpush1.msra.mxu0 %v280
    %908 = vmatprep.subr.mxu0 0.0
    %909 = vmatpush1.msra.mxu0 %v281
    %910 = vmatprep.subr.mxu0 0.0
    %911 = vmatpush1.msra.mxu0 %v282
    %912 = vmatprep.subr.mxu0 0.0
    %913 = vmatpush1.msra.mxu0 %v283
    %914 = vmatprep.subr.mxu0 0.0
    %915 = vmatpush1.msra.mxu0 %v284
    %916 = vmatprep.subr.mxu0 0.0
    %917 = vmatpush1.msra.mxu0 0.0
    %918 = vmatprep.subr.mxu0 0.0
    %919 = vmatpush1.msra.mxu0 0.0
    %920 = vmatprep.subr.mxu0 0.0
    %921 = vmatpush1.msra.mxu0 0.0
    %922 = vmatprep.subr.mxu0 0.0
    %923 = vmatpush1.msra.mxu0 0.0
    %924 = vmatprep.subr.mxu0 0.0
    %925 = vmatpush1.msra.mxu0 0.0
    %926 = vmatprep.subr.mxu0 0.0
    %927 = vmatpush1.msra.mxu0 0.0
    %928 = vmatprep.subr.mxu0 0.0
    %929 = vmatpush1.msra.mxu0 0.0
    %930 = vmatprep.subr.mxu0 0.0
    %931 = vmatpush1.msra.mxu0 0.0
    %932 = vmatprep.subr.mxu0 0.0
    %933 = vmatpush1.msra.mxu0 0.0
    %934 = vmatprep.subr.mxu0 0.0
    %935 = vmatpush1.msra.mxu0 0.0
    %936 = vmatprep.subr.mxu0 0.0
    %937 = vmatpush1.msra.mxu0 0.0
    %938 = vmatprep.subr.mxu0 0.0
    %939 = vmatpush1.msra.mxu0 0.0
    %940 = vmatprep.subr.mxu0 0.0
    %941 = vmatpush1.msra.mxu0 0.0
    %942 = vmatprep.subr.mxu0 0.0
    %943 = vmatpush1.msra.mxu0 0.0
    %944 = vmatprep.subr.mxu0 0.0
    %945 = vmatpush1.msra.mxu0 0.0
    %946 = vmatprep.subr.mxu0 0.0
    %947 = vmatpush1.msra.mxu0 0.0
    %948 = vmatprep.subr.mxu0 0.0
    %949 = vmatpush1.msra.mxu0 0.0
    %950 = vmatprep.subr.mxu0 0.0
    %951 = vmatpush1.msra.mxu0 0.0
    %952 = vmatprep.subr.mxu0 0.0
    %953 = vmatpush1.msra.mxu0 0.0
    %954 = vmatprep.subr.mxu0 0.0
    %955 = vmatpush1.msra.mxu0 0.0
    %956 = vmatprep.subr.mxu0 0.0
    %957 = vmatpush1.msra.mxu0 0.0
    %958 = vmatprep.subr.mxu0 0.0
    %959 = vmatpush1.msra.mxu0 0.0
    %960 = vmatprep.subr.mxu0 0.0
    %961 = vmatpush1.msra.mxu0 0.0
    %962 = vmatprep.subr.mxu0 0.0
    %963 = vmatpush1.msra.mxu0 0.0
    %964 = vmatprep.mubr.f32.mxu0 0.0
    %965 = vmatmul.mubr.f32.gmra.mrb[0].mxu0 %v898
    %v966 = vpop.f32.mrb[0].mxu0
    %v967 = vadd.f32 %v61, %v966
    %v968 = vpop.f32.mrb[0].mxu0
    %969 = vdwg.mxu0
    %v970 = vxor.u32 %v967, 2147483648
    %v971 = vmul.f32 %v970, 1.442695
    %v972 = vpow.pop %v971
    %v973 = vadd.f32 %v972, 1.0
    %v974 = vrcp.pop %v973
    %v975 = vmul.f32 1.0, %v974
    %v976 = vtanh.pop %v967
    %v977 = vmul.f32 %v975, %v783
    %979 = vrot.lane.b32.xlu0 %v976, 64
    %v980 = vpop.permute.xlu0 %979
    %v982 = vmul.f32 %v975, %v980
    %984 = vrot.lane.b32.xlu0 %v982, 32
    %v985 = vpop.permute.xlu0 %984
    %v987 = vadd.f32 %v977, %v985
    %v988 = vtanh.pop %v987
    %990 = vrot.lane.b32.xlu0 %v988, 64
    %v991 = vpop.permute.xlu0 %990
    %v993 = vmul.f32 %v975, %v991
    %995 = vrot.lane.b32.xlu0 %v891, 64
    %v996 = vpop.permute.xlu0 %995
    %v998 = vsel %vm168, %v128, %v996
    %v1000 = vsel %vm178, %v998, 0
    %1002 = vmatprep.subr.mxu0 0.0
    %1003 = vmatpush1.msra.mxu0 %v170
    %1004 = vmatprep.subr.mxu0 0.0
    %1005 = vmatpush1.msra.mxu0 %v171
    %1006 = vmatprep.subr.mxu0 0.0
    %1007 = vmatpush1.msra.mxu0 %v172
    %1008 = vmatprep.subr.mxu0 0.0
    %1009 = vmatpush1.msra.mxu0 %v173
    %1010 = vmatprep.subr.mxu0 0.0
    %1011 = vmatpush1.msra.mxu0 %v174
    %1012 = vmatprep.subr.mxu0 0.0
    %1013 = vmatpush1.msra.mxu0 %v175
    %1014 = vmatprep.subr.mxu0 0.0
    %1015 = vmatpush1.msra.mxu0 %v176
    %1016 = vmatprep.subr.mxu0 0.0
    %1017 = vmatpush1.msra.mxu0 %v177
    %1018 = vmatprep.subr.mxu0 0.0
    %1019 = vmatpush1.msra.mxu0 0.0
    %1020 = vmatprep.subr.mxu0 0.0
    %1021 = vmatpush1.msra.mxu0 0.0
    %1022 = vmatprep.subr.mxu0 0.0
    %1023 = vmatpush1.msra.mxu0 0.0
    %1024 = vmatprep.subr.mxu0 0.0
    %1025 = vmatpush1.msra.mxu0 0.0
    %1026 = vmatprep.subr.mxu0 0.0
    %1027 = vmatpush1.msra.mxu0 0.0
    %1028 = vmatprep.subr.mxu0 0.0
    %1029 = vmatpush1.msra.mxu0 0.0
    %1030 = vmatprep.subr.mxu0 0.0
    %1031 = vmatpush1.msra.mxu0 0.0
    %1032 = vmatprep.subr.mxu0 0.0
    %1033 = vmatpush1.msra.mxu0 0.0
    %1034 = vmatprep.subr.mxu0 0.0
    %1035 = vmatpush1.msra.mxu0 0.0
    %1036 = vmatprep.subr.mxu0 0.0
    %1037 = vmatpush1.msra.mxu0 0.0
    %1038 = vmatprep.subr.mxu0 0.0
    %1039 = vmatpush1.msra.mxu0 0.0
    %1040 = vmatprep.subr.mxu0 0.0
    %1041 = vmatpush1.msra.mxu0 0.0
    %1042 = vmatprep.subr.mxu0 0.0
    %1043 = vmatpush1.msra.mxu0 0.0
    %1044 = vmatprep.subr.mxu0 0.0
    %1045 = vmatpush1.msra.mxu0 0.0
    %1046 = vmatprep.subr.mxu0 0.0
    %1047 = vmatpush1.msra.mxu0 0.0
    %1048 = vmatprep.subr.mxu0 0.0
    %1049 = vmatpush1.msra.mxu0 0.0
    %1050 = vmatprep.subr.mxu0 0.0
    %1051 = vmatpush1.msra.mxu0 0.0
    %1052 = vmatprep.subr.mxu0 0.0
    %1053 = vmatpush1.msra.mxu0 0.0
    %1054 = vmatprep.subr.mxu0 0.0
    %1055 = vmatpush1.msra.mxu0 0.0
    %1056 = vmatprep.subr.mxu0 0.0
    %1057 = vmatpush1.msra.mxu0 0.0
    %1058 = vmatprep.subr.mxu0 0.0
    %1059 = vmatpush1.msra.mxu0 0.0
    %1060 = vmatprep.subr.mxu0 0.0
    %1061 = vmatpush1.msra.mxu0 0.0
    %1062 = vmatprep.subr.mxu0 0.0
    %1063 = vmatpush1.msra.mxu0 0.0
    %1064 = vmatprep.subr.mxu0 0.0
    %1065 = vmatpush1.msra.mxu0 0.0
    %1066 = vmatprep.mubr.f32.mxu0 0.0
    %1067 = vmatmul.mubr.f32.gmra.mrb[0].mxu0 %v1000
    %v1068 = vpop.f32.mrb[0].mxu0
    %v1069 = vadd.f32 %v54, %v1068
    %v1070 = vpop.f32.mrb[0].mxu0
    %1071 = vdwg.mxu0
    %v1072 = vxor.u32 %v1069, 2147483648
    %v1073 = vmul.f32 %v1072, 1.442695
    %v1074 = vpow.pop %v1073
    %v1075 = vadd.f32 %v1074, 1.0
    %v1076 = vrcp.pop %v1075
    %v1077 = vmul.f32 1.0, %v1076
    %v1078 = vtanh.pop %v1069
    %v1079 = vmul.f32 %v1077, %v885
    %1081 = vrot.lane.b32.xlu0 %v1078, 64
    %v1082 = vpop.permute.xlu0 %1081
    %v1084 = vmul.f32 %v1077, %v1082
    %1086 = vrot.lane.b32.xlu0 %v1084, 32
    %v1087 = vpop.permute.xlu0 %1086
    %v1089 = vadd.f32 %v1079, %v1087
    %v1090 = vtanh.pop %v1089
    %1092 = vrot.lane.b32.xlu0 %v1090, 64
    %v1093 = vpop.permute.xlu0 %1092
    %v1095 = vmul.f32 %v1077, %v1093
    %1097 = vrot.lane.b32.xlu0 %v993, 64
    %v1098 = vpop.permute.xlu0 %1097
    %v1100 = vsel %vm168, %v115, %v1098
    %v1102 = vsel %vm178, %v1100, 0
    %1104 = vmatprep.subr.mxu0 0.0
    %1105 = vmatpush1.msra.mxu0 %v277
    %1106 = vmatprep.subr.mxu0 0.0
    %1107 = vmatpush1.msra.mxu0 %v278
    %1108 = vmatprep.subr.mxu0 0.0
    %1109 = vmatpush1.msra.mxu0 %v279
    %1110 = vmatprep.subr.mxu0 0.0
    %1111 = vmatpush1.msra.mxu0 %v280
    %1112 = vmatprep.subr.mxu0 0.0
    %1113 = vmatpush1.msra.mxu0 %v281
    %1114 = vmatprep.subr.mxu0 0.0
    %1115 = vmatpush1.msra.mxu0 %v282
    %1116 = vmatprep.subr.mxu0 0.0
    %1117 = vmatpush1.msra.mxu0 %v283
    %1118 = vmatprep.subr.mxu0 0.0
    %1119 = vmatpush1.msra.mxu0 %v284
    %1120 = vmatprep.subr.mxu0 0.0
    %1121 = vmatpush1.msra.mxu0 0.0
    %1122 = vmatprep.subr.mxu0 0.0
    %1123 = vmatpush1.msra.mxu0 0.0
    %1124 = vmatprep.subr.mxu0 0.0
    %1125 = vmatpush1.msra.mxu0 0.0
    %1126 = vmatprep.subr.mxu0 0.0
    %1127 = vmatpush1.msra.mxu0 0.0
    %1128 = vmatprep.subr.mxu0 0.0
    %1129 = vmatpush1.msra.mxu0 0.0
    %1130 = vmatprep.subr.mxu0 0.0
    %1131 = vmatpush1.msra.mxu0 0.0
    %1132 = vmatprep.subr.mxu0 0.0
    %1133 = vmatpush1.msra.mxu0 0.0
    %1134 = vmatprep.subr.mxu0 0.0
    %1135 = vmatpush1.msra.mxu0 0.0
    %1136 = vmatprep.subr.mxu0 0.0
    %1137 = vmatpush1.msra.mxu0 0.0
    %1138 = vmatprep.subr.mxu0 0.0
    %1139 = vmatpush1.msra.mxu0 0.0
    %1140 = vmatprep.subr.mxu0 0.0
    %1141 = vmatpush1.msra.mxu0 0.0
    %1142 = vmatprep.subr.mxu0 0.0
    %1143 = vmatpush1.msra.mxu0 0.0
    %1144 = vmatprep.subr.mxu0 0.0
    %1145 = vmatpush1.msra.mxu0 0.0
    %1146 = vmatprep.subr.mxu0 0.0
    %1147 = vmatpush1.msra.mxu0 0.0
    %1148 = vmatprep.subr.mxu0 0.0
    %1149 = vmatpush1.msra.mxu0 0.0
    %1150 = vmatprep.subr.mxu0 0.0
    %1151 = vmatpush1.msra.mxu0 0.0
    %1152 = vmatprep.subr.mxu0 0.0
    %1153 = vmatpush1.msra.mxu0 0.0
    %1154 = vmatprep.subr.mxu0 0.0
    %1155 = vmatpush1.msra.mxu0 0.0
    %1156 = vmatprep.subr.mxu0 0.0
    %1157 = vmatpush1.msra.mxu0 0.0
    %1158 = vmatprep.subr.mxu0 0.0
    %1159 = vmatpush1.msra.mxu0 0.0
    %1160 = vmatprep.subr.mxu0 0.0
    %1161 = vmatpush1.msra.mxu0 0.0
    %1162 = vmatprep.subr.mxu0 0.0
    %1163 = vmatpush1.msra.mxu0 0.0
    %1164 = vmatprep.subr.mxu0 0.0
    %1165 = vmatpush1.msra.mxu0 0.0
    %1166 = vmatprep.subr.mxu0 0.0
    %1167 = vmatpush1.msra.mxu0 0.0
    %1168 = vmatprep.mubr.f32.mxu0 0.0
    %1169 = vmatmul.mubr.f32.gmra.mrb[0].mxu0 %v1102
    %v1170 = vpop.f32.mrb[0].mxu0
    %v1171 = vadd.f32 %v61, %v1170
    %v1172 = vpop.f32.mrb[0].mxu0
    %1173 = vdwg.mxu0
    %v1174 = vxor.u32 %v1171, 2147483648
    %v1175 = vmul.f32 %v1174, 1.442695
    %v1176 = vpow.pop %v1175
    %v1177 = vadd.f32 %v1176, 1.0
    %v1178 = vrcp.pop %v1177
    %v1179 = vmul.f32 1.0, %v1178
    %v1180 = vtanh.pop %v1171
    %v1181 = vmul.f32 %v1179, %v987
    %1183 = vrot.lane.b32.xlu0 %v1180, 64
    %v1184 = vpop.permute.xlu0 %1183
    %v1186 = vmul.f32 %v1179, %v1184
    %1188 = vrot.lane.b32.xlu0 %v1186, 32
    %v1189 = vpop.permute.xlu0 %1188
    %v1191 = vadd.f32 %v1181, %v1189
    %v1192 = vtanh.pop %v1191
    %1194 = vrot.lane.b32.xlu0 %v1192, 64
    %v1195 = vpop.permute.xlu0 %1194
    %v1197 = vmul.f32 %v1179, %v1195
    %1199 = vrot.lane.b32.xlu0 %v1095, 64
    %v1200 = vpop.permute.xlu0 %1199
    %v1202 = vsel %vm168, %v141, %v1200
    %v1204 = vsel %vm178, %v1202, 0
    %1206 = vmatprep.subr.mxu0 0.0
    %1207 = vmatpush1.msra.mxu0 %v170
    %1208 = vmatprep.subr.mxu0 0.0
    %1209 = vmatpush1.msra.mxu0 %v171
    %1210 = vmatprep.subr.mxu0 0.0
    %1211 = vmatpush1.msra.mxu0 %v172
    %1212 = vmatprep.subr.mxu0 0.0
    %1213 = vmatpush1.msra.mxu0 %v173
    %1214 = vmatprep.subr.mxu0 0.0
    %1215 = vmatpush1.msra.mxu0 %v174
    %1216 = vmatprep.subr.mxu0 0.0
    %1217 = vmatpush1.msra.mxu0 %v175
    %1218 = vmatprep.subr.mxu0 0.0
    %1219 = vmatpush1.msra.mxu0 %v176
    %1220 = vmatprep.subr.mxu0 0.0
    %1221 = vmatpush1.msra.mxu0 %v177
    %1222 = vmatprep.subr.mxu0 0.0
    %1223 = vmatpush1.msra.mxu0 0.0
    %1224 = vmatprep.subr.mxu0 0.0
    %1225 = vmatpush1.msra.mxu0 0.0
    %1226 = vmatprep.subr.mxu0 0.0
    %1227 = vmatpush1.msra.mxu0 0.0
    %1228 = vmatprep.subr.mxu0 0.0
    %1229 = vmatpush1.msra.mxu0 0.0
    %1230 = vmatprep.subr.mxu0 0.0
    %1231 = vmatpush1.msra.mxu0 0.0
    %1232 = vmatprep.subr.mxu0 0.0
    %1233 = vmatpush1.msra.mxu0 0.0
    %1234 = vmatprep.subr.mxu0 0.0
    %1235 = vmatpush1.msra.mxu0 0.0
    %1236 = vmatprep.subr.mxu0 0.0
    %1237 = vmatpush1.msra.mxu0 0.0
    %1238 = vmatprep.subr.mxu0 0.0
    %1239 = vmatpush1.msra.mxu0 0.0
    %1240 = vmatprep.subr.mxu0 0.0
    %1241 = vmatpush1.msra.mxu0 0.0
    %1242 = vmatprep.subr.mxu0 0.0
    %1243 = vmatpush1.msra.mxu0 0.0
    %1244 = vmatprep.subr.mxu0 0.0
    %1245 = vmatpush1.msra.mxu0 0.0
    %1246 = vmatprep.subr.mxu0 0.0
    %1247 = vmatpush1.msra.mxu0 0.0
    %1248 = vmatprep.subr.mxu0 0.0
    %1249 = vmatpush1.msra.mxu0 0.0
    %1250 = vmatprep.subr.mxu0 0.0
    %1251 = vmatpush1.msra.mxu0 0.0
    %1252 = vmatprep.subr.mxu0 0.0
    %1253 = vmatpush1.msra.mxu0 0.0
    %1254 = vmatprep.subr.mxu0 0.0
    %1255 = vmatpush1.msra.mxu0 0.0
    %1256 = vmatprep.subr.mxu0 0.0
    %1257 = vmatpush1.msra.mxu0 0.0
    %1258 = vmatprep.subr.mxu0 0.0
    %1259 = vmatpush1.msra.mxu0 0.0
    %1260 = vmatprep.subr.mxu0 0.0
    %1261 = vmatpush1.msra.mxu0 0.0
    %1262 = vmatprep.subr.mxu0 0.0
    %1263 = vmatpush1.msra.mxu0 0.0
    %1264 = vmatprep.subr.mxu0 0.0
    %1265 = vmatpush1.msra.mxu0 0.0
    %1266 = vmatprep.subr.mxu0 0.0
    %1267 = vmatpush1.msra.mxu0 0.0
    %1268 = vmatprep.subr.mxu0 0.0
    %1269 = vmatpush1.msra.mxu0 0.0
    %1270 = vmatprep.mubr.f32.mxu0 0.0
    %1271 = vmatmul.mubr.f32.gmra.mrb[0].mxu0 %v1204
    %v1272 = vpop.f32.mrb[0].mxu0
    %v1273 = vadd.f32 %v54, %v1272
    %v1274 = vpop.f32.mrb[0].mxu0
    %1275 = vdwg.mxu0
    %v1276 = vxor.u32 %v1273, 2147483648
    %v1277 = vmul.f32 %v1276, 1.442695
    %v1278 = vpow.pop %v1277
    %v1279 = vadd.f32 %v1278, 1.0
    %v1280 = vrcp.pop %v1279
    %v1281 = vmul.f32 1.0, %v1280
    %v1282 = vtanh.pop %v1273
    %v1283 = vmul.f32 %v1281, %v1089
    %1285 = vrot.lane.b32.xlu0 %v1282, 64
    %v1286 = vpop.permute.xlu0 %1285
    %v1288 = vmul.f32 %v1281, %v1286
    %1290 = vrot.lane.b32.xlu0 %v1288, 32
    %v1291 = vpop.permute.xlu0 %1290
    %v1293 = vadd.f32 %v1283, %v1291
    %v1294 = vtanh.pop %v1293
    %1296 = vrot.lane.b32.xlu0 %v1294, 64
    %v1297 = vpop.permute.xlu0 %1296
    %v1299 = vmul.f32 %v1281, %v1297
    %1301 = vrot.lane.b32.xlu0 %v1197, 64
    %v1302 = vpop.permute.xlu0 %1301
    %v1304 = vsel %vm168, %v102, %v1302
    %v1306 = vsel %vm178, %v1304, 0
    %1308 = vmatprep.subr.mxu0 0.0
    %1309 = vmatpush1.msra.mxu0 %v277
    %1310 = vmatprep.subr.mxu0 0.0
    %1311 = vmatpush1.msra.mxu0 %v278
    %1312 = vmatprep.subr.mxu0 0.0
    %1313 = vmatpush1.msra.mxu0 %v279
    %1314 = vmatprep.subr.mxu0 0.0
    %1315 = vmatpush1.msra.mxu0 %v280
    %1316 = vmatprep.subr.mxu0 0.0
    %1317 = vmatpush1.msra.mxu0 %v281
    %1318 = vmatprep.subr.mxu0 0.0
    %1319 = vmatpush1.msra.mxu0 %v282
    %1320 = vmatprep.subr.mxu0 0.0
    %1321 = vmatpush1.msra.mxu0 %v283
    %1322 = vmatprep.subr.mxu0 0.0
    %1323 = vmatpush1.msra.mxu0 %v284
    %1324 = vmatprep.subr.mxu0 0.0
    %1325 = vmatpush1.msra.mxu0 0.0
    %1326 = vmatprep.subr.mxu0 0.0
    %1327 = vmatpush1.msra.mxu0 0.0
    %1328 = vmatprep.subr.mxu0 0.0
    %1329 = vmatpush1.msra.mxu0 0.0
    %1330 = vmatprep.subr.mxu0 0.0
    %1331 = vmatpush1.msra.mxu0 0.0
    %1332 = vmatprep.subr.mxu0 0.0
    %1333 = vmatpush1.msra.mxu0 0.0
    %1334 = vmatprep.subr.mxu0 0.0
    %1335 = vmatpush1.msra.mxu0 0.0
    %1336 = vmatprep.subr.mxu0 0.0
    %1337 = vmatpush1.msra.mxu0 0.0
    %1338 = vmatprep.subr.mxu0 0.0
    %1339 = vmatpush1.msra.mxu0 0.0
    %1340 = vmatprep.subr.mxu0 0.0
    %1341 = vmatpush1.msra.mxu0 0.0
    %1342 = vmatprep.subr.mxu0 0.0
    %1343 = vmatpush1.msra.mxu0 0.0
    %1344 = vmatprep.subr.mxu0 0.0
    %1345 = vmatpush1.msra.mxu0 0.0
    %1346 = vmatprep.subr.mxu0 0.0
    %1347 = vmatpush1.msra.mxu0 0.0
    %1348 = vmatprep.subr.mxu0 0.0
    %1349 = vmatpush1.msra.mxu0 0.0
    %1350 = vmatprep.subr.mxu0 0.0
    %1351 = vmatpush1.msra.mxu0 0.0
    %1352 = vmatprep.subr.mxu0 0.0
    %1353 = vmatpush1.msra.mxu0 0.0
    %1354 = vmatprep.subr.mxu0 0.0
    %1355 = vmatpush1.msra.mxu0 0.0
    %1356 = vmatprep.subr.mxu0 0.0
    %1357 = vmatpush1.msra.mxu0 0.0
    %1358 = vmatprep.subr.mxu0 0.0
    %1359 = vmatpush1.msra.mxu0 0.0
    %1360 = vmatprep.subr.mxu0 0.0
    %1361 = vmatpush1.msra.mxu0 0.0
    %1362 = vmatprep.subr.mxu0 0.0
    %1363 = vmatpush1.msra.mxu0 0.0
    %1364 = vmatprep.subr.mxu0 0.0
    %1365 = vmatpush1.msra.mxu0 0.0
    %1366 = vmatprep.subr.mxu0 0.0
    %1367 = vmatpush1.msra.mxu0 0.0
    %1368 = vmatprep.subr.mxu0 0.0
    %1369 = vmatpush1.msra.mxu0 0.0
    %1370 = vmatprep.subr.mxu0 0.0
    %1371 = vmatpush1.msra.mxu0 0.0
    %1372 = vmatprep.mubr.f32.mxu0 0.0
    %1373 = vmatmul.mubr.f32.gmra.mrb[0].mxu0 %v1306
    %v1374 = vpop.f32.mrb[0].mxu0
    %v1375 = vadd.f32 %v61, %v1374
    %v1376 = vpop.f32.mrb[0].mxu0
    %1377 = vdwg.mxu0
    %v1378 = vxor.u32 %v1375, 2147483648
    %v1379 = vmul.f32 %v1378, 1.442695
    %v1380 = vpow.pop %v1379
    %v1381 = vadd.f32 %v1380, 1.0
    %v1382 = vrcp.pop %v1381
    %v1383 = vmul.f32 1.0, %v1382
    %v1384 = vtanh.pop %v1375
    %v1385 = vmul.f32 %v1383, %v1191
    %1387 = vrot.lane.b32.xlu0 %v1384, 64
    %v1388 = vpop.permute.xlu0 %1387
    %v1390 = vmul.f32 %v1383, %v1388
    %1392 = vrot.lane.b32.xlu0 %v1390, 32
    %v1393 = vpop.permute.xlu0 %1392
    %v1395 = vadd.f32 %v1385, %v1393
    %v1396 = vtanh.pop %v1395
    %1398 = vrot.lane.b32.xlu0 %v1396, 64
    %v1399 = vpop.permute.xlu0 %1398
    %v1401 = vmul.f32 %v1383, %v1399
    %1403 = vrot.lane.b32.xlu0 %v1299, 64
    %v1404 = vpop.permute.xlu0 %1403
    %v1406 = vsel %vm168, %v154, %v1404
    %v1408 = vsel %vm178, %v1406, 0
    %1410 = vmatprep.subr.mxu0 0.0
    %1411 = vmatpush1.msra.mxu0 %v170
    %1412 = vmatprep.subr.mxu0 0.0
    %1413 = vmatpush1.msra.mxu0 %v171
    %1414 = vmatprep.subr.mxu0 0.0
    %1415 = vmatpush1.msra.mxu0 %v172
    %1416 = vmatprep.subr.mxu0 0.0
    %1417 = vmatpush1.msra.mxu0 %v173
    %1418 = vmatprep.subr.mxu0 0.0
    %1419 = vmatpush1.msra.mxu0 %v174
    %1420 = vmatprep.subr.mxu0 0.0
    %1421 = vmatpush1.msra.mxu0 %v175
    %1422 = vmatprep.subr.mxu0 0.0
    %1423 = vmatpush1.msra.mxu0 %v176
    %1424 = vmatprep.subr.mxu0 0.0
    %1425 = vmatpush1.msra.mxu0 %v177
    %1426 = vmatprep.subr.mxu0 0.0
    %1427 = vmatpush1.msra.mxu0 0.0
    %1428 = vmatprep.subr.mxu0 0.0
    %1429 = vmatpush1.msra.mxu0 0.0
    %1430 = vmatprep.subr.mxu0 0.0
    %1431 = vmatpush1.msra.mxu0 0.0
    %1432 = vmatprep.subr.mxu0 0.0
    %1433 = vmatpush1.msra.mxu0 0.0
    %1434 = vmatprep.subr.mxu0 0.0
    %1435 = vmatpush1.msra.mxu0 0.0
    %1436 = vmatprep.subr.mxu0 0.0
    %1437 = vmatpush1.msra.mxu0 0.0
    %1438 = vmatprep.subr.mxu0 0.0
    %1439 = vmatpush1.msra.mxu0 0.0
    %1440 = vmatprep.subr.mxu0 0.0
    %1441 = vmatpush1.msra.mxu0 0.0
    %1442 = vmatprep.subr.mxu0 0.0
    %1443 = vmatpush1.msra.mxu0 0.0
    %1444 = vmatprep.subr.mxu0 0.0
    %1445 = vmatpush1.msra.mxu0 0.0
    %1446 = vmatprep.subr.mxu0 0.0
    %1447 = vmatpush1.msra.mxu0 0.0
    %1448 = vmatprep.subr.mxu0 0.0
    %1449 = vmatpush1.msra.mxu0 0.0
    %1450 = vmatprep.subr.mxu0 0.0
    %1451 = vmatpush1.msra.mxu0 0.0
    %1452 = vmatprep.subr.mxu0 0.0
    %1453 = vmatpush1.msra.mxu0 0.0
    %1454 = vmatprep.subr.mxu0 0.0
    %1455 = vmatpush1.msra.mxu0 0.0
    %1456 = vmatprep.subr.mxu0 0.0
    %1457 = vmatpush1.msra.mxu0 0.0
    %1458 = vmatprep.subr.mxu0 0.0
    %1459 = vmatpush1.msra.mxu0 0.0
    %1460 = vmatprep.subr.mxu0 0.0
    %1461 = vmatpush1.msra.mxu0 0.0
    %1462 = vmatprep.subr.mxu0 0.0
    %1463 = vmatpush1.msra.mxu0 0.0
    %1464 = vmatprep.subr.mxu0 0.0
    %1465 = vmatpush1.msra.mxu0 0.0
    %1466 = vmatprep.subr.mxu0 0.0
    %1467 = vmatpush1.msra.mxu0 0.0
    %1468 = vmatprep.subr.mxu0 0.0
    %1469 = vmatpush1.msra.mxu0 0.0
    %1470 = vmatprep.subr.mxu0 0.0
    %1471 = vmatpush1.msra.mxu0 0.0
    %1472 = vmatprep.subr.mxu0 0.0
    %1473 = vmatpush1.msra.mxu0 0.0
    %1474 = vmatprep.mubr.f32.mxu0 0.0
    %1475 = vmatmul.mubr.f32.gmra.mrb[0].mxu0 %v1408
    %v1476 = vpop.f32.mrb[0].mxu0
    %v1477 = vadd.f32 %v54, %v1476
    %v1478 = vpop.f32.mrb[0].mxu0
    %1479 = vdwg.mxu0
    %v1480 = vxor.u32 %v1477, 2147483648
    %v1481 = vmul.f32 %v1480, 1.442695
    %v1482 = vpow.pop %v1481
    %v1483 = vadd.f32 %v1482, 1.0
    %v1484 = vrcp.pop %v1483
    %v1485 = vmul.f32 1.0, %v1484
    %v1486 = vtanh.pop %v1477
    %v1487 = vmul.f32 %v1485, %v1293
    %1489 = vrot.lane.b32.xlu0 %v1486, 64
    %v1490 = vpop.permute.xlu0 %1489
    %v1492 = vmul.f32 %v1485, %v1490
    %1494 = vrot.lane.b32.xlu0 %v1492, 32
    %v1495 = vpop.permute.xlu0 %1494
    %v1497 = vadd.f32 %v1487, %v1495
    %v1498 = vtanh.pop %v1497
    %1500 = vrot.lane.b32.xlu0 %v1498, 64
    %v1501 = vpop.permute.xlu0 %1500
    %v1503 = vmul.f32 %v1485, %v1501
    %1505 = vrot.lane.b32.xlu0 %v1401, 64
    %v1506 = vpop.permute.xlu0 %1505
    %v1508 = vsel %vm168, %v89, %v1506
    %v1510 = vsel %vm178, %v1508, 0
    %1512 = vmatprep.subr.mxu0 0.0
    %1513 = vmatpush1.msra.mxu0 %v277
    %1514 = vmatprep.subr.mxu0 0.0
    %1515 = vmatpush1.msra.mxu0 %v278
    %1516 = vmatprep.subr.mxu0 0.0
    %1517 = vmatpush1.msra.mxu0 %v279
    %1518 = vmatprep.subr.mxu0 0.0
    %1519 = vmatpush1.msra.mxu0 %v280
    %1520 = vmatprep.subr.mxu0 0.0
    %1521 = vmatpush1.msra.mxu0 %v281
    %1522 = vmatprep.subr.mxu0 0.0
    %1523 = vmatpush1.msra.mxu0 %v282
    %1524 = vmatprep.subr.mxu0 0.0
    %1525 = vmatpush1.msra.mxu0 %v283
    %1526 = vmatprep.subr.mxu0 0.0
    %1527 = vmatpush1.msra.mxu0 %v284
    %1528 = vmatprep.subr.mxu0 0.0
    %1529 = vmatpush1.msra.mxu0 0.0
    %1530 = vmatprep.subr.mxu0 0.0
    %1531 = vmatpush1.msra.mxu0 0.0
    %1532 = vmatprep.subr.mxu0 0.0
    %1533 = vmatpush1.msra.mxu0 0.0
    %1534 = vmatprep.subr.mxu0 0.0
    %1535 = vmatpush1.msra.mxu0 0.0
    %1536 = vmatprep.subr.mxu0 0.0
    %1537 = vmatpush1.msra.mxu0 0.0
    %1538 = vmatprep.subr.mxu0 0.0
    %1539 = vmatpush1.msra.mxu0 0.0
    %1540 = vmatprep.subr.mxu0 0.0
    %1541 = vmatpush1.msra.mxu0 0.0
    %1542 = vmatprep.subr.mxu0 0.0
    %1543 = vmatpush1.msra.mxu0 0.0
    %1544 = vmatprep.subr.mxu0 0.0
    %1545 = vmatpush1.msra.mxu0 0.0
    %1546 = vmatprep.subr.mxu0 0.0
    %1547 = vmatpush1.msra.mxu0 0.0
    %1548 = vmatprep.subr.mxu0 0.0
    %1549 = vmatpush1.msra.mxu0 0.0
    %1550 = vmatprep.subr.mxu0 0.0
    %1551 = vmatpush1.msra.mxu0 0.0
    %1552 = vmatprep.subr.mxu0 0.0
    %1553 = vmatpush1.msra.mxu0 0.0
    %1554 = vmatprep.subr.mxu0 0.0
    %1555 = vmatpush1.msra.mxu0 0.0
    %1556 = vmatprep.subr.mxu0 0.0
    %1557 = vmatpush1.msra.mxu0 0.0
    %1558 = vmatprep.subr.mxu0 0.0
    %1559 = vmatpush1.msra.mxu0 0.0
    %1560 = vmatprep.subr.mxu0 0.0
    %1561 = vmatpush1.msra.mxu0 0.0
    %1562 = vmatprep.subr.mxu0 0.0
    %1563 = vmatpush1.msra.mxu0 0.0
    %1564 = vmatprep.subr.mxu0 0.0
    %1565 = vmatpush1.msra.mxu0 0.0
    %1566 = vmatprep.subr.mxu0 0.0
    %1567 = vmatpush1.msra.mxu0 0.0
    %1568 = vmatprep.subr.mxu0 0.0
    %1569 = vmatpush1.msra.mxu0 0.0
    %1570 = vmatprep.subr.mxu0 0.0
    %1571 = vmatpush1.msra.mxu0 0.0
    %1572 = vmatprep.subr.mxu0 0.0
    %1573 = vmatpush1.msra.mxu0 0.0
    %1574 = vmatprep.subr.mxu0 0.0
    %1575 = vmatpush1.msra.mxu0 0.0
    %1576 = vmatprep.mubr.f32.mxu0 0.0
    %1577 = vmatmul.mubr.f32.gmra.mrb[0].mxu0 %v1510
    %v1578 = vpop.f32.mrb[0].mxu0
    %v1579 = vadd.f32 %v61, %v1578
    %v1580 = vpop.f32.mrb[0].mxu0
    %1581 = vdwg.mxu0
    %v1582 = vxor.u32 %v1579, 2147483648
    %v1583 = vmul.f32 %v1582, 1.442695
    %v1584 = vpow.pop %v1583
    %v1585 = vadd.f32 %v1584, 1.0
    %v1586 = vrcp.pop %v1585
    %v1587 = vmul.f32 1.0, %v1586
    %v1588 = vtanh.pop %v1579
    %v1589 = vmul.f32 %v1587, %v1395
    %1591 = vrot.lane.b32.xlu0 %v1588, 64
    %v1592 = vpop.permute.xlu0 %1591
    %v1594 = vmul.f32 %v1587, %v1592
    %1596 = vrot.lane.b32.xlu0 %v1594, 32
    %v1597 = vpop.permute.xlu0 %1596
    %v1599 = vadd.f32 %v1589, %v1597
    %v1600 = vtanh.pop %v1599
    %1602 = vrot.lane.b32.xlu0 %v1600, 64
    %v1603 = vpop.permute.xlu0 %1602
    %v1605 = vmul.f32 %v1587, %v1603
    %1607 = vrot.lane.b32.xlu0 %v1503, 64
    %v1608 = vpop.permute.xlu0 %1607
    %v1610 = vsel %vm168, %v167, %v1608
    %v1612 = vsel %vm178, %v1610, 0
    %1614 = vmatprep.subr.mxu0 0.0
    %1615 = vmatpush1.msra.mxu0 %v170
    %1616 = vmatprep.subr.mxu0 0.0
    %1617 = vmatpush1.msra.mxu0 %v171
    %1618 = vmatprep.subr.mxu0 0.0
    %1619 = vmatpush1.msra.mxu0 %v172
    %1620 = vmatprep.subr.mxu0 0.0
    %1621 = vmatpush1.msra.mxu0 %v173
    %1622 = vmatprep.subr.mxu0 0.0
    %1623 = vmatpush1.msra.mxu0 %v174
    %1624 = vmatprep.subr.mxu0 0.0
    %1625 = vmatpush1.msra.mxu0 %v175
    %1626 = vmatprep.subr.mxu0 0.0
    %1627 = vmatpush1.msra.mxu0 %v176
    %1628 = vmatprep.subr.mxu0 0.0
    %1629 = vmatpush1.msra.mxu0 %v177
    %1630 = vmatprep.subr.mxu0 0.0
    %1631 = vmatpush1.msra.mxu0 0.0
    %1632 = vmatprep.subr.mxu0 0.0
    %1633 = vmatpush1.msra.mxu0 0.0
    %1634 = vmatprep.subr.mxu0 0.0
    %1635 = vmatpush1.msra.mxu0 0.0
    %1636 = vmatprep.subr.mxu0 0.0
    %1637 = vmatpush1.msra.mxu0 0.0
    %1638 = vmatprep.subr.mxu0 0.0
    %1639 = vmatpush1.msra.mxu0 0.0
    %1640 = vmatprep.subr.mxu0 0.0
    %1641 = vmatpush1.msra.mxu0 0.0
    %1642 = vmatprep.subr.mxu0 0.0
    %1643 = vmatpush1.msra.mxu0 0.0
    %1644 = vmatprep.subr.mxu0 0.0
    %1645 = vmatpush1.msra.mxu0 0.0
    %1646 = vmatprep.subr.mxu0 0.0
    %1647 = vmatpush1.msra.mxu0 0.0
    %1648 = vmatprep.subr.mxu0 0.0
    %1649 = vmatpush1.msra.mxu0 0.0
    %1650 = vmatprep.subr.mxu0 0.0
    %1651 = vmatpush1.msra.mxu0 0.0
    %1652 = vmatprep.subr.mxu0 0.0
    %1653 = vmatpush1.msra.mxu0 0.0
    %1654 = vmatprep.subr.mxu0 0.0
    %1655 = vmatpush1.msra.mxu0 0.0
    %1656 = vmatprep.subr.mxu0 0.0
    %1657 = vmatpush1.msra.mxu0 0.0
    %1658 = vmatprep.subr.mxu0 0.0
    %1659 = vmatpush1.msra.mxu0 0.0
    %1660 = vmatprep.subr.mxu0 0.0
    %1661 = vmatpush1.msra.mxu0 0.0
    %1662 = vmatprep.subr.mxu0 0.0
    %1663 = vmatpush1.msra.mxu0 0.0
    %1664 = vmatprep.subr.mxu0 0.0
    %1665 = vmatpush1.msra.mxu0 0.0
    %1666 = vmatprep.subr.mxu0 0.0
    %1667 = vmatpush1.msra.mxu0 0.0
    %1668 = vmatprep.subr.mxu0 0.0
    %1669 = vmatpush1.msra.mxu0 0.0
    %1670 = vmatprep.subr.mxu0 0.0
    %1671 = vmatpush1.msra.mxu0 0.0
    %1672 = vmatprep.subr.mxu0 0.0
    %1673 = vmatpush1.msra.mxu0 0.0
    %1674 = vmatprep.subr.mxu0 0.0
    %1675 = vmatpush1.msra.mxu0 0.0
    %1676 = vmatprep.subr.mxu0 0.0
    %1677 = vmatpush1.msra.mxu0 0.0
    %1678 = vmatprep.mubr.f32.mxu0 0.0
    %1679 = vmatmul.mubr.f32.gmra.mrb[0].mxu0 %v1612
    %v1680 = vpop.f32.mrb[0].mxu0
    %v1681 = vadd.f32 %v54, %v1680
    %v1682 = vpop.f32.mrb[0].mxu0
    %1683 = vdwg.mxu0
    %v1684 = vxor.u32 %v1681, 2147483648
    %v1685 = vmul.f32 %v1684, 1.442695
    %v1686 = vpow.pop %v1685
    %v1687 = vadd.f32 %v1686, 1.0
    %v1688 = vrcp.pop %v1687
    %v1689 = vmul.f32 1.0, %v1688
    %v1690 = vtanh.pop %v1681
    %v1691 = vmul.f32 %v1689, %v1497
    %1693 = vrot.lane.b32.xlu0 %v1690, 64
    %v1694 = vpop.permute.xlu0 %1693
    %v1696 = vmul.f32 %v1689, %v1694
    %1698 = vrot.lane.b32.xlu0 %v1696, 32
    %v1699 = vpop.permute.xlu0 %1698
    %v1701 = vadd.f32 %v1691, %v1699
    %v1702 = vtanh.pop %v1701
    %1704 = vrot.lane.b32.xlu0 %v1702, 64
    %v1705 = vpop.permute.xlu0 %1704
    %v1707 = vmul.f32 %v1689, %v1705
    %1709 = vrot.lane.b32.xlu0 %v1605, 64
    %v1710 = vpop.permute.xlu0 %1709
    %v1712 = vsel %vm168, %v76, %v1710
    %v1714 = vsel %vm178, %v1712, 0
    %1716 = vmatprep.subr.mxu0 0.0
    %1717 = vmatpush1.msra.mxu0 %v277
    %1718 = vmatprep.subr.mxu0 0.0
    %1719 = vmatpush1.msra.mxu0 %v278
    %1720 = vmatprep.subr.mxu0 0.0
    %1721 = vmatpush1.msra.mxu0 %v279
    %1722 = vmatprep.subr.mxu0 0.0
    %1723 = vmatpush1.msra.mxu0 %v280
    %1724 = vmatprep.subr.mxu0 0.0
    %1725 = vmatpush1.msra.mxu0 %v281
    %1726 = vmatprep.subr.mxu0 0.0
    %1727 = vmatpush1.msra.mxu0 %v282
    %1728 = vmatprep.subr.mxu0 0.0
    %1729 = vmatpush1.msra.mxu0 %v283
    %1730 = vmatprep.subr.mxu0 0.0
    %1731 = vmatpush1.msra.mxu0 %v284
    %1732 = vmatprep.subr.mxu0 0.0
    %1733 = vmatpush1.msra.mxu0 0.0
    %1734 = vmatprep.subr.mxu0 0.0
    %1735 = vmatpush1.msra.mxu0 0.0
    %1736 = vmatprep.subr.mxu0 0.0
    %1737 = vmatpush1.msra.mxu0 0.0
    %1738 = vmatprep.subr.mxu0 0.0
    %1739 = vmatpush1.msra.mxu0 0.0
    %1740 = vmatprep.subr.mxu0 0.0
    %1741 = vmatpush1.msra.mxu0 0.0
    %1742 = vmatprep.subr.mxu0 0.0
    %1743 = vmatpush1.msra.mxu0 0.0
    %1744 = vmatprep.subr.mxu0 0.0
    %1745 = vmatpush1.msra.mxu0 0.0
    %1746 = vmatprep.subr.mxu0 0.0
    %1747 = vmatpush1.msra.mxu0 0.0
    %1748 = vmatprep.subr.mxu0 0.0
    %1749 = vmatpush1.msra.mxu0 0.0
    %1750 = vmatprep.subr.mxu0 0.0
    %1751 = vmatpush1.msra.mxu0 0.0
    %1752 = vmatprep.subr.mxu0 0.0
    %1753 = vmatpush1.msra.mxu0 0.0
    %1754 = vmatprep.subr.mxu0 0.0
    %1755 = vmatpush1.msra.mxu0 0.0
    %1756 = vmatprep.subr.mxu0 0.0
    %1757 = vmatpush1.msra.mxu0 0.0
    %1758 = vmatprep.subr.mxu0 0.0
    %1759 = vmatpush1.msra.mxu0 0.0
    %1760 = vmatprep.subr.mxu0 0.0
    %1761 = vmatpush1.msra.mxu0 0.0
    %1762 = vmatprep.subr.mxu0 0.0
    %1763 = vmatpush1.msra.mxu0 0.0
    %1764 = vmatprep.subr.mxu0 0.0
    %1765 = vmatpush1.msra.mxu0 0.0
    %1766 = vmatprep.subr.mxu0 0.0
    %1767 = vmatpush1.msra.mxu0 0.0
    %1768 = vmatprep.subr.mxu0 0.0
    %1769 = vmatpush1.msra.mxu0 0.0
    %1770 = vmatprep.subr.mxu0 0.0
    %1771 = vmatpush1.msra.mxu0 0.0
    %1772 = vmatprep.subr.mxu0 0.0
    %1773 = vmatpush1.msra.mxu0 0.0
    %1774 = vmatprep.subr.mxu0 0.0
    %1775 = vmatpush1.msra.mxu0 0.0
    %1776 = vmatprep.subr.mxu0 0.0
    %1777 = vmatpush1.msra.mxu0 0.0
    %1778 = vmatprep.subr.mxu0 0.0
    %1779 = vmatpush1.msra.mxu0 0.0
    %1780 = vmatprep.mubr.f32.mxu0 0.0
    %1781 = vmatmul.mubr.f32.gmra.mrb[0].mxu0 %v1714
    %v1782 = vpop.f32.mrb[0].mxu0
    %v1783 = vadd.f32 %v61, %v1782
    %v1784 = vpop.f32.mrb[0].mxu0
    %1785 = vdwg.mxu0
    %v1786 = vxor.u32 %v1783, 2147483648
    %v1787 = vmul.f32 %v1786, 1.442695
    %v1788 = vpow.pop %v1787
    %v1789 = vadd.f32 %v1788, 1.0
    %v1790 = vrcp.pop %v1789
    %v1791 = vmul.f32 1.0, %v1790
    %v1792 = vtanh.pop %v1783
    %v1793 = vmul.f32 %v1791, %v1599
    %1795 = vrot.lane.b32.xlu0 %v1792, 64
    %v1796 = vpop.permute.xlu0 %1795
    %v1798 = vmul.f32 %v1791, %v1796
    %1800 = vrot.lane.b32.xlu0 %v1798, 32
    %v1801 = vpop.permute.xlu0 %1800
    %v1803 = vadd.f32 %v1793, %v1801
    %v1804 = vtanh.pop %v1803
    %1806 = vrot.lane.b32.xlu0 %v1804, 64
    %v1807 = vpop.permute.xlu0 %1806
    %v1809 = vmul.f32 %v1791, %v1807
    %v1811 = vrot.slane %v1809, 7
    %v1813 = vsel %vm75, %v1707, %v1811
    %v1815 = vrot.slane %v1707, 1
    %v1817 = vsel %vm75, %v1815, %v1809
    %v1818 = vmul.f32 %v275, %v1813
    %1820 = vrot.lane.b32.xlu0 %v1818, 32
    %v1821 = vpop.permute.xlu0 %1820
    %vm1823 = vcmask 254976
    %v1824 = vsel %vm1823, %v1821, 0.0
    %1825 = vadd.xlane.f32.xlu0 %v1824
    %v1826 = vpop.xlane.xlu0 %1825
    %v1827 = vmul.f32 %v1809, %v1817
    %1829 = vrot.lane.b32.xlu0 %v1827, 32
    %v1830 = vpop.permute.xlu0 %1829
    %v1832 = vsel %vm1823, %v1830, 0.0
    %1833 = vadd.xlane.f32.xlu0 %v1832
    %v1834 = vpop.xlane.xlu0 %1833
    %v1835 = vadd.f32 %v1826, %v1834
    %v1836 = vmul.f32 %v483, %v1813
    %1838 = vrot.lane.b32.xlu0 %v1836, 32
    %v1839 = vpop.permute.xlu0 %1838
    %v1841 = vsel %vm1823, %v1839, 0.0
    %1842 = vadd.xlane.f32.xlu0 %v1841
    %v1843 = vpop.xlane.xlu0 %1842
    %v1844 = vmul.f32 %v1605, %v1817
    %1846 = vrot.lane.b32.xlu0 %v1844, 32
    %v1847 = vpop.permute.xlu0 %1846
    %v1849 = vsel %vm1823, %v1847, 0.0
    %1850 = vadd.xlane.f32.xlu0 %v1849
    %v1851 = vpop.xlane.xlu0 %1850
    %v1852 = vadd.f32 %v1843, %v1851
    %v1853 = vmul.f32 %v687, %v1813
    %1855 = vrot.lane.b32.xlu0 %v1853, 32
    %v1856 = vpop.permute.xlu0 %1855
    %v1858 = vsel %vm1823, %v1856, 0.0
    %1859 = vadd.xlane.f32.xlu0 %v1858
    %v1860 = vpop.xlane.xlu0 %1859
    %v1861 = vmul.f32 %v1401, %v1817
    %1863 = vrot.lane.b32.xlu0 %v1861, 32
    %v1864 = vpop.permute.xlu0 %1863
    %v1866 = vsel %vm1823, %v1864, 0.0
    %1867 = vadd.xlane.f32.xlu0 %v1866
    %v1868 = vpop.xlane.xlu0 %1867
    %v1869 = vadd.f32 %v1860, %v1868
    %v1870 = vmul.f32 %v891, %v1813
    %1872 = vrot.lane.b32.xlu0 %v1870, 32
    %v1873 = vpop.permute.xlu0 %1872
    %v1875 = vsel %vm1823, %v1873, 0.0
    %1876 = vadd.xlane.f32.xlu0 %v1875
    %v1877 = vpop.xlane.xlu0 %1876
    %v1878 = vmul.f32 %v1197, %v1817
    %1880 = vrot.lane.b32.xlu0 %v1878, 32
    %v1881 = vpop.permute.xlu0 %1880
    %v1883 = vsel %vm1823, %v1881, 0.0
    %1884 = vadd.xlane.f32.xlu0 %v1883
    %v1885 = vpop.xlane.xlu0 %1884
    %v1886 = vadd.f32 %v1877, %v1885
    %v1887 = vmul.f32 %v1095, %v1813
    %1889 = vrot.lane.b32.xlu0 %v1887, 32
    %v1890 = vpop.permute.xlu0 %1889
    %v1892 = vsel %vm1823, %v1890, 0.0
    %1893 = vadd.xlane.f32.xlu0 %v1892
    %v1894 = vpop.xlane.xlu0 %1893
    %v1895 = vmul.f32 %v993, %v1817
    %1897 = vrot.lane.b32.xlu0 %v1895, 32
    %v1898 = vpop.permute.xlu0 %1897
    %v1900 = vsel %vm1823, %v1898, 0.0
    %1901 = vadd.xlane.f32.xlu0 %v1900
    %v1902 = vpop.xlane.xlu0 %1901
    %v1903 = vadd.f32 %v1894, %v1902
    %v1904 = vmul.f32 %v1299, %v1813
    %1906 = vrot.lane.b32.xlu0 %v1904, 32
    %v1907 = vpop.permute.xlu0 %1906
    %v1909 = vsel %vm1823, %v1907, 0.0
    %1910 = vadd.xlane.f32.xlu0 %v1909
    %v1911 = vpop.xlane.xlu0 %1910
    %v1912 = vmul.f32 %v789, %v1817
    %1914 = vrot.lane.b32.xlu0 %v1912, 32
    %v1915 = vpop.permute.xlu0 %1914
    %v1917 = vsel %vm1823, %v1915, 0.0
    %1918 = vadd.xlane.f32.xlu0 %v1917
    %v1919 = vpop.xlane.xlu0 %1918
    %v1920 = vadd.f32 %v1911, %v1919
    %v1921 = vmul.f32 %v1503, %v1813
    %1923 = vrot.lane.b32.xlu0 %v1921, 32
    %v1924 = vpop.permute.xlu0 %1923
    %v1926 = vsel %vm1823, %v1924, 0.0
    %1927 = vadd.xlane.f32.xlu0 %v1926
    %v1928 = vpop.xlane.xlu0 %1927
    %v1929 = vmul.f32 %v585, %v1817
    %1931 = vrot.lane.b32.xlu0 %v1929, 32
    %v1932 = vpop.permute.xlu0 %1931
    %v1934 = vsel %vm1823, %v1932, 0.0
    %1935 = vadd.xlane.f32.xlu0 %v1934
    %v1936 = vpop.xlane.xlu0 %1935
    %v1937 = vadd.f32 %v1928, %v1936
    %v1938 = vmul.f32 %v1707, %v1813
    %1940 = vrot.lane.b32.xlu0 %v1938, 32
    %v1941 = vpop.permute.xlu0 %1940
    %v1943 = vsel %vm1823, %v1941, 0.0
    %1944 = vadd.xlane.f32.xlu0 %v1943
    %v1945 = vpop.xlane.xlu0 %1944
    %v1946 = vmul.f32 %v381, %v1817
    %1948 = vrot.lane.b32.xlu0 %v1946, 32
    %v1949 = vpop.permute.xlu0 %1948
    %v1951 = vsel %vm1823, %v1949, 0.0
    %1952 = vadd.xlane.f32.xlu0 %v1951
    %v1953 = vpop.xlane.xlu0 %1952
    %v1954 = vadd.f32 %v1945, %v1953
    %vm1955 = vcmask 7168
    %v1956 = vsel %vm1955, %v1835, %v1852
    %vm1957 = vcmask 15360
    %v1958 = vsel %vm1957, %v1956, %v1869
    %vm1959 = vcmask 23552
    %v1960 = vsel %vm1959, %v1958, %v1886
    %vm1961 = vcmask 31744
    %v1962 = vsel %vm1961, %v1960, %v1903
    %vm1963 = vcmask 39936
    %v1964 = vsel %vm1963, %v1962, %v1920
    %vm1965 = vcmask 48128
    %v1966 = vsel %vm1965, %v1964, %v1937
    %vm1967 = vcmask 56320
    %v1968 = vsel %vm1967, %v1966, %v1954
    %vm1969 = vcmask 58368
    %v1970 = vsel %vm1969, %v1968, -inf
    %1971 = vmax.xlane.f32.xlu0 %v1970
    %v1972 = vpop.xlane.xlu0 %1971
    %v1973 = vsub.f32 %v1968, %v1972
    %v1974 = vmul.f32 %v1973, 1.442695
    %v1975 = vpow.pop %v1974
    %v1976 = vsel %vm1969, %v1975, 0.0
    %1977 = vadd.xlane.f32.xlu0 %v1976
    %v1978 = vpop.xlane.xlu0 %1977
    %v1979 = vrcp.pop %v1978
    %v1980 = vmul.f32 %v1975, %v1979
    %1982 = vset.pattern.permute.xlu0 0
    %1983 = vperm.xlu0 %1982, %v1980
    %v1984 = vpop.permute.xlu0 %1983
    %v1986 = vmul.f32 %v1984, %v275
    %v1987 = vadd.f32 %v1986, 0.0
    %v1988 = vmul.f32 %v1984, %v1809
    %v1989 = vadd.f32 %v1988, 0.0
    %1990 = vset.pattern.permute.xlu0 1
    %1991 = vperm.xlu0 %1990, %v1980
    %v1992 = vpop.permute.xlu0 %1991
    %v1994 = vmul.f32 %v1992, %v483
    %v1995 = vadd.f32 %v1987, %v1994
    %v1996 = vmul.f32 %v1992, %v1605
    %v1997 = vadd.f32 %v1989, %v1996
    %1998 = vset.pattern.permute.xlu0 2
    %1999 = vperm.xlu0 %1998, %v1980
    %v2000 = vpop.permute.xlu0 %1999
    %v2002 = vmul.f32 %v2000, %v687
    %v2003 = vadd.f32 %v1995, %v2002
    %v2004 = vmul.f32 %v2000, %v1401
    %v2005 = vadd.f32 %v1997, %v2004
    %2006 = vset.pattern.permute.xlu0 3
    %2007 = vperm.xlu0 %2006, %v1980
    %v2008 = vpop.permute.xlu0 %2007
    %v2010 = vmul.f32 %v2008, %v891
    %v2011 = vadd.f32 %v2003, %v2010
    %v2012 = vmul.f32 %v2008, %v1197
    %v2013 = vadd.f32 %v2005, %v2012
    %2014 = vset.pattern.permute.xlu0 4
    %2015 = vperm.xlu0 %2014, %v1980
    %v2016 = vpop.permute.xlu0 %2015
    %v2018 = vmul.f32 %v2016, %v1095
    %v2019 = vadd.f32 %v2011, %v2018
    %v2020 = vmul.f32 %v2016, %v993
    %v2021 = vadd.f32 %v2013, %v2020
    %2022 = vset.pattern.permute.xlu0 5
    %2023 = vperm.xlu0 %2022, %v1980
    %v2024 = vpop.permute.xlu0 %2023
    %v2026 = vmul.f32 %v2024, %v1299
    %v2027 = vadd.f32 %v2019, %v2026
    %v2028 = vmul.f32 %v2024, %v789
    %v2029 = vadd.f32 %v2021, %v2028
    %2030 = vset.pattern.permute.xlu0 6
    %2031 = vperm.xlu0 %2030, %v1980
    %v2032 = vpop.permute.xlu0 %2031
    %v2034 = vmul.f32 %v2032, %v1503
    %v2035 = vadd.f32 %v2027, %v2034
    %v2036 = vmul.f32 %v2032, %v585
    %v2037 = vadd.f32 %v2029, %v2036
    %2038 = vset.pattern.permute.xlu0 7
    %2039 = vperm.xlu0 %2038, %v1980
    %v2040 = vpop.permute.xlu0 %2039
    %v2042 = vmul.f32 %v2040, %v1707
    %v2043 = vadd.f32 %v2035, %v2042
    %v2044 = vmul.f32 %v2040, %v381
    %v2045 = vadd.f32 %v2037, %v2044
    %2047 = vrot.lane.b32.xlu0 %v2043, 32
    %v2048 = vpop.permute.xlu0 %2047
    %2051 = vrot.lane.b32.xlu0 %v2045, 64
    %v2052 = vpop.permute.xlu0 %2051
    %v2054 = vsel %vm168, %v2048, %v2052
    %v2055 = vld [vmem:[%s6] sm:$0xff]
    %v2056 = vld [vmem:[%s6 + $0x8] sm:$0xff]
    %v2057 = vld [vmem:[%s6 + $0x10] sm:$0xff]
    %v2058 = vld [vmem:[%s6 + $0x18] sm:$0xff]
    %v2059 = vld [vmem:[%s6 + $0x20] sm:$0xff]
    %v2060 = vld [vmem:[%s6 + $0x28] sm:$0xff]
    %v2061 = vld [vmem:[%s6 + $0x30] sm:$0xff]
    %v2062 = vld [vmem:[%s6 + $0x38] sm:$0xff]
    %v2063 = vld [vmem:[%s7] sm:$0x1]
    %v2065 = vlaneseq
    %v2066 = vshrl.u32 %v2065, 7
    %v2067 = vsub.s32 0, %v2066
    %v2068 = vrot.slane %v2063, %v2067
    %v2071 = vsel %vm178, %v2054, 0
    %2073 = vmatprep.subr.mxu0 0.0
    %2074 = vmatpush1.msra.mxu0 %v2055
    %2075 = vmatprep.subr.mxu0 0.0
    %2076 = vmatpush1.msra.mxu0 %v2056
    %2077 = vmatprep.subr.mxu0 0.0
    %2078 = vmatpush1.msra.mxu0 %v2057
    %2079 = vmatprep.subr.mxu0 0.0
    %2080 = vmatpush1.msra.mxu0 %v2058
    %2081 = vmatprep.subr.mxu0 0.0
    %2082 = vmatpush1.msra.mxu0 %v2059
    %2083 = vmatprep.subr.mxu0 0.0
    %2084 = vmatpush1.msra.mxu0 %v2060
    %2085 = vmatprep.subr.mxu0 0.0
    %2086 = vmatpush1.msra.mxu0 %v2061
    %2087 = vmatprep.subr.mxu0 0.0
    %2088 = vmatpush1.msra.mxu0 %v2062
    %2089 = vmatprep.subr.mxu0 0.0
    %2090 = vmatpush1.msra.mxu0 0.0
    %2091 = vmatprep.subr.mxu0 0.0
    %2092 = vmatpush1.msra.mxu0 0.0
    %2093 = vmatprep.subr.mxu0 0.0
    %2094 = vmatpush1.msra.mxu0 0.0
    %2095 = vmatprep.subr.mxu0 0.0
    %2096 = vmatpush1.msra.mxu0 0.0
    %2097 = vmatprep.subr.mxu0 0.0
    %2098 = vmatpush1.msra.mxu0 0.0
    %2099 = vmatprep.subr.mxu0 0.0
    %2100 = vmatpush1.msra.mxu0 0.0
    %2101 = vmatprep.subr.mxu0 0.0
    %2102 = vmatpush1.msra.mxu0 0.0
    %2103 = vmatprep.subr.mxu0 0.0
    %2104 = vmatpush1.msra.mxu0 0.0
    %2105 = vmatprep.subr.mxu0 0.0
    %2106 = vmatpush1.msra.mxu0 0.0
    %2107 = vmatprep.subr.mxu0 0.0
    %2108 = vmatpush1.msra.mxu0 0.0
    %2109 = vmatprep.subr.mxu0 0.0
    %2110 = vmatpush1.msra.mxu0 0.0
    %2111 = vmatprep.subr.mxu0 0.0
    %2112 = vmatpush1.msra.mxu0 0.0
    %2113 = vmatprep.subr.mxu0 0.0
    %2114 = vmatpush1.msra.mxu0 0.0
    %2115 = vmatprep.subr.mxu0 0.0
    %2116 = vmatpush1.msra.mxu0 0.0
    %2117 = vmatprep.subr.mxu0 0.0
    %2118 = vmatpush1.msra.mxu0 0.0
    %2119 = vmatprep.subr.mxu0 0.0
    %2120 = vmatpush1.msra.mxu0 0.0
    %2121 = vmatprep.subr.mxu0 0.0
    %2122 = vmatpush1.msra.mxu0 0.0
    %2123 = vmatprep.subr.mxu0 0.0
    %2124 = vmatpush1.msra.mxu0 0.0
    %2125 = vmatprep.subr.mxu0 0.0
    %2126 = vmatpush1.msra.mxu0 0.0
    %2127 = vmatprep.subr.mxu0 0.0
    %2128 = vmatpush1.msra.mxu0 0.0
    %2129 = vmatprep.subr.mxu0 0.0
    %2130 = vmatpush1.msra.mxu0 0.0
    %2131 = vmatprep.subr.mxu0 0.0
    %2132 = vmatpush1.msra.mxu0 0.0
    %2133 = vmatprep.subr.mxu0 0.0
    %2134 = vmatpush1.msra.mxu0 0.0
    %2135 = vmatprep.subr.mxu0 0.0
    %2136 = vmatpush1.msra.mxu0 0.0
    %2137 = vmatprep.mubr.f32.mxu0 0.0
    %2138 = vmatmul.mubr.f32.gmra.mrb[0].mxu0 %v2071
    %v2139 = vpop.f32.mrb[0].mxu0
    %v2140 = vadd.f32 %v2068, %v2139
    %v2141 = vpop.f32.mrb[0].mxu0
    %2142 = vdwg.mxu0
    %v2143 = vld [vmem:[%s8] sm:$0xff]
    %v2144 = vld [vmem:[%s8 + $0x8] sm:$0xff]
    %v2145 = vld [vmem:[%s8 + $0x10] sm:$0xff]
    %v2146 = vld [vmem:[%s8 + $0x18] sm:$0xff]
    %v2147 = vld [vmem:[%s9] sm:$0x1]
    %v2149 = vlaneseq
    %v2150 = vshrl.u32 %v2149, 7
    %v2151 = vsub.s32 0, %v2150
    %v2152 = vrot.slane %v2147, %v2151
    %v2155 = vsel %vm168, %v2140, 0
    %2157 = vmatprep.subr.mxu0 0.0
    %2158 = vmatpush1.msra.mxu0 %v2143
    %2159 = vmatprep.subr.mxu0 0.0
    %2160 = vmatpush1.msra.mxu0 %v2144
    %2161 = vmatprep.subr.mxu0 0.0
    %2162 = vmatpush1.msra.mxu0 %v2145
    %2163 = vmatprep.subr.mxu0 0.0
    %2164 = vmatpush1.msra.mxu0 %v2146
    %2165 = vmatprep.subr.mxu0 0.0
    %2166 = vmatpush1.msra.mxu0 0.0
    %2167 = vmatprep.subr.mxu0 0.0
    %2168 = vmatpush1.msra.mxu0 0.0
    %2169 = vmatprep.subr.mxu0 0.0
    %2170 = vmatpush1.msra.mxu0 0.0
    %2171 = vmatprep.subr.mxu0 0.0
    %2172 = vmatpush1.msra.mxu0 0.0
    %2173 = vmatprep.subr.mxu0 0.0
    %2174 = vmatpush1.msra.mxu0 0.0
    %2175 = vmatprep.subr.mxu0 0.0
    %2176 = vmatpush1.msra.mxu0 0.0
    %2177 = vmatprep.subr.mxu0 0.0
    %2178 = vmatpush1.msra.mxu0 0.0
    %2179 = vmatprep.subr.mxu0 0.0
    %2180 = vmatpush1.msra.mxu0 0.0
    %2181 = vmatprep.subr.mxu0 0.0
    %2182 = vmatpush1.msra.mxu0 0.0
    %2183 = vmatprep.subr.mxu0 0.0
    %2184 = vmatpush1.msra.mxu0 0.0
    %2185 = vmatprep.subr.mxu0 0.0
    %2186 = vmatpush1.msra.mxu0 0.0
    %2187 = vmatprep.subr.mxu0 0.0
    %2188 = vmatpush1.msra.mxu0 0.0
    %2189 = vmatprep.subr.mxu0 0.0
    %2190 = vmatpush1.msra.mxu0 0.0
    %2191 = vmatprep.subr.mxu0 0.0
    %2192 = vmatpush1.msra.mxu0 0.0
    %2193 = vmatprep.subr.mxu0 0.0
    %2194 = vmatpush1.msra.mxu0 0.0
    %2195 = vmatprep.subr.mxu0 0.0
    %2196 = vmatpush1.msra.mxu0 0.0
    %2197 = vmatprep.subr.mxu0 0.0
    %2198 = vmatpush1.msra.mxu0 0.0
    %2199 = vmatprep.subr.mxu0 0.0
    %2200 = vmatpush1.msra.mxu0 0.0
    %2201 = vmatprep.subr.mxu0 0.0
    %2202 = vmatpush1.msra.mxu0 0.0
    %2203 = vmatprep.subr.mxu0 0.0
    %2204 = vmatpush1.msra.mxu0 0.0
    %2205 = vmatprep.subr.mxu0 0.0
    %2206 = vmatpush1.msra.mxu0 0.0
    %2207 = vmatprep.subr.mxu0 0.0
    %2208 = vmatpush1.msra.mxu0 0.0
    %2209 = vmatprep.subr.mxu0 0.0
    %2210 = vmatpush1.msra.mxu0 0.0
    %2211 = vmatprep.subr.mxu0 0.0
    %2212 = vmatpush1.msra.mxu0 0.0
    %2213 = vmatprep.subr.mxu0 0.0
    %2214 = vmatpush1.msra.mxu0 0.0
    %2215 = vmatprep.subr.mxu0 0.0
    %2216 = vmatpush1.msra.mxu0 0.0
    %2217 = vmatprep.subr.mxu0 0.0
    %2218 = vmatpush1.msra.mxu0 0.0
    %2219 = vmatprep.subr.mxu0 0.0
    %2220 = vmatpush1.msra.mxu0 0.0
    %2221 = vmatprep.mubr.f32.mxu0 0.0
    %2222 = vmatmul.mubr.f32.gmra.mrb[0].mxu0 %v2155
    %v2223 = vpop.f32.mrb[0].mxu0
    %v2224 = vadd.f32 %v2152, %v2223
    %v2225 = vpop.f32.mrb[0].mxu0
    %2226 = vdwg.mxu0
    %2227 = vst.msk [vmem:[#allocation5] sm:$0x3] %vm1969, %v2224
    // Predicated region
    $region46: #{att_lstm_forward.1} parent=1 // pred_check
      _
    $region47: #{att_lstm_forward.1} parent=1 // pred_check_branch
      %2229 = sbr.rel (0) target = $region49
    $region48: #{att_lstm_forward.1} parent=1 // pred_region
      %s2231 = ssub.s32 32, 32
      %2232 = vsyncadd [#allocation3], %s2231
      %s2234 = sshll.u32 [#allocation5], 4
      %s2235 = int_to_ptr.vmem [resolvable:$true] %s2234
      %2237 = dma.vmem_to_hbm [thread:$0]  %s2235, 32, %s10, [#allocation3]
    $region49: #{att_lstm_forward.1} parent=1 // pred_fallthru
      _
    // Predicated region
    $region50: #{att_lstm_forward.1} parent=1 // pred_check
      _
    $region51: #{att_lstm_forward.1} parent=1 // pred_check_branch
      %2239 = sbr.rel (0) target = $region53
    $region52: #{att_lstm_forward.1} parent=1 // pred_region
      %2240 = dma.done [#allocation3], 32
    $region53: #{att_lstm_forward.1} parent=1 // pred_fallthru
      _
    %2241 = vsyncpa [#allocation3], 1
    %2242 = vsyncpa [#allocation4], 1

</llo_original>
